<compile_context>
chip_gen: v6e
topology: v6e:2x2x1
jax: 0.10.0
libtpu: 0.0.40
codegen_flags: <defaults>
</compile_context>

<pallas_src>
import functools

import jax
import jax.numpy as jnp
from jax.experimental import pallas as pl
from jax.experimental.pallas import tpu as pltpu

EPS = 1e-4          # ProtGNN's self.epsilon
NEG_INF = -1e30
LANE = 128


def _ceil_to(n, m):
    return -(-n // m) * m


def _pow2_at_least(n, lo):
    n = max(n, lo)
    return 1 << (n - 1).bit_length()


def _pad_axis(a, axis, target):
    size = a.shape[axis]
    if size == target:
        return a
    pads = [(0, 0)] * a.ndim
    pads[axis] = (0, target - size)
    return jnp.pad(a, pads)


# ---------------------------------------------------------------------------
# Kernels
# ---------------------------------------------------------------------------
def _gnn_block_kernel(x_ref, adj_ref, pool_ref, w1_ref, wcat_ref, lwT_ref,
                      const_ref, node_emb_ref, rows_ref, *, H_pad, P_pad, C_pad):
    """One grid step = G graphs packed block-diagonally into M = G*N_pad rows."""
    f32 = jnp.float32
    bf16 = jnp.bfloat16

    adj = adj_ref[...]                                    # [M, M] block-diag, bf16

    # fused constants: b1 | b2 | b3 | |p|^2 | class-mask   (all 128-aligned slices)
    b1 = const_ref[:, 0:H_pad]
    b2 = const_ref[:, H_pad:2 * H_pad]
    b3 = const_ref[:, 2 * H_pad:3 * H_pad]
    p_sq = const_ref[:, 3 * H_pad:3 * H_pad + P_pad]
    cmask = const_ref[:, 3 * H_pad + P_pad:3 * H_pad + P_pad + C_pad]

    def gcn_relu(h_bf, w_bf, b):
        # PyG GCNConv: out = A_hat @ (h @ W) + b ; backbone applies ReLU after.
        hw = jnp.dot(h_bf, w_bf, preferred_element_type=f32)
        agg = jnp.dot(adj, hw.astype(bf16), preferred_element_type=f32)
        return jnp.maximum(agg + b, 0.0)

    h1 = gcn_relu(x_ref[...], w1_ref[...], b1)
    h2 = gcn_relu(h1.astype(bf16), wcat_ref[:, 0:H_pad], b2)
    h3 = gcn_relu(h2.astype(bf16), wcat_ref[:, H_pad:2 * H_pad], b3)
    node_emb_ref[...] = h3.astype(bf16)                   # emb1 (bf16 writeback)

    # mean readout over each graph's valid nodes: [G, M] @ [M, H]  (f32 for accuracy)
    g = jnp.dot(pool_ref[...], h3, preferred_element_type=f32)          # [G, H_pad]
    rows_ref[:, 0:H_pad] = g                                            # emb2

    # prototype squared-L2 distances: ||g - p||^2 = -2 g.p^T + |g|^2 + |p|^2
    protoT = wcat_ref[:, 2 * H_pad:2 * H_pad + P_pad]                   # [H_pad, P_pad]
    xp = jnp.dot(g.astype(bf16), protoT, preferred_element_type=f32)    # [G, P_pad]
    g_sq = jnp.sum(g * g, axis=-1, keepdims=True)
    dist = -2.0 * xp + g_sq + p_sq
    rows_ref[:, H_pad:H_pad + P_pad] = dist                             # min_distances

    d = jnp.maximum(dist, 0.0)                 # fp-cancellation guard before the log
    sim = jnp.log((d + 1.0) / (d + EPS))       # prototype activations (exact divide)

    # last_layer: Linear(P -> C, bias=False), pre-transposed to [P, C]
    logits = jnp.dot(sim.astype(bf16), lwT_ref[...], preferred_element_type=f32)
    rows_ref[:, H_pad + P_pad:H_pad + P_pad + C_pad] = logits

    # softmax over the real classes only (padded class lanes masked to -1e30)
    masked = logits + cmask
    m = jnp.max(masked, axis=-1, keepdims=True)
    e = jnp.exp(masked - m)
    rows_ref[:, H_pad + P_pad + C_pad:H_pad + P_pad + 2 * C_pad] = (
        e / jnp.sum(e, axis=-1, keepdims=True))


def _protgnn_plus_kernel(sim_ref, lwT_ref, cmask_ref, logits_ref, prob_ref):
    logits = jnp.dot(sim_ref[...].astype(jnp.bfloat16), lwT_ref[...],
                     preferred_element_type=jnp.float32)
    logits_ref[...] = logits
    masked = logits + cmask_ref[...]
    m = jnp.max(masked, axis=-1, keepdims=True)
    e = jnp.exp(masked - m)
    prob_ref[...] = e / jnp.sum(e, axis=-1, keepdims=True)


# ---------------------------------------------------------------------------
# Wrapper
# ---------------------------------------------------------------------------
def gnn_nets_forward(x_b, adj_b, node_counts, params,
                     protgnn_plus=False, similarity=None,
                     target_rows=256, node_emb_dtype=jnp.bfloat16):
    """Mirrors GnnNets.forward(data, protgnn_plus, similarity).

    x_b         : [B, Nmax, F] per-graph node features (rows >= node_counts[b] are 0)
    adj_b       : [B, Nmax, Nmax] per-graph normalized adjacency D^-1/2 (A+I) D^-1/2
    node_counts : [B] number of valid nodes per graph
    target_rows : MXU rows per grid step (~128 for v5e, ~256 for v6e/v7x)
    Returns (logits [B,C], prob [B,C], emb1 [B,Nmax,H] (bf16 by default),
             emb2 [B,H], min_distances [B,P]).
    """
    f32 = jnp.float32
    bf16 = jnp.bfloat16

    C, P = params['last_w'].shape
    C_pad = _ceil_to(C, LANE)
    P_pad = _ceil_to(P, LANE)

    # classifier pre-transposed + padded; class mask for padded-class softmax lanes
    lastwT = _pad_axis(_pad_axis(params['last_w'].T.astype(f32), 0, P_pad),
                       1, C_pad).astype(bf16)
    cmask = jnp.where(jnp.arange(C_pad) < C, 0.0, NEG_INF).astype(f32)[None, :]

    vmem = pl.BlockSpec(memory_space=pltpu.MemorySpace.VMEM)

    if protgnn_plus:
        B = similarity.shape[0]
        B8 = _ceil_to(B, 8)
        sim_pad = _pad_axis(_pad_axis(similarity.astype(f32), 0, B8), 1, P_pad)
        logits_p, prob_p = pl.pallas_call(
            _protgnn_plus_kernel,
            out_shape=(jax.ShapeDtypeStruct((B8, C_pad), f32),
                       jax.ShapeDtypeStruct((B8, C_pad), f32)),
            in_specs=[vmem, vmem, vmem],
            out_specs=(vmem, vmem),
        )(sim_pad, lastwT, cmask)
        return logits_p[:B, :C], prob_p[:B, :C], None, None, None

    B, Nmax, F = x_b.shape
    H = params['w1'].shape[1]
    F_pad = _ceil_to(F, LANE)
    H_pad = _ceil_to(H, LANE)

    # --- node padding & graph grouping -------------------------------------
    # N_pad: power of two >= 16 (bf16 sublane tile) so M = G*N_pad can always be
    # a multiple of 128 (lane-dense block-diagonal adjacency).
    if Nmax <= LANE:
        N_pad = _pow2_at_least(Nmax, 16)
    else:
        N_pad = _ceil_to(Nmax, LANE)
    base = max(1, LANE // N_pad)              # smallest G giving a 128-multiple M
    g_full = max(base, target_rows // N_pad)  # fill the MXU (~128-256 rows/step)
    G = min(g_full, _ceil_to(B, base))        # don't pad the batch more than needed
    M = G * N_pad
    S = _ceil_to(B, G) // G                   # grid steps (graph groups)
    B_pad = S * G

    # --- mean-readout pooling rows (block-diagonal layout, f32) -------------
    counts = jnp.maximum(_pad_axis(node_counts.astype(f32), 0, B_pad), 1.0)
    real_graph = jnp.arange(B_pad) < B
    nvalid = (jnp.arange(N_pad)[None, :] < counts[:, None]) & real_graph[:, None]
    pool_small = jnp.where(nvalid, 1.0 / counts[:, None], 0.0)       # [B_pad, N_pad]
    eyeG = jnp.eye(G, dtype=f32)
    pool = jnp.einsum('sgn,gh->sghn',
                      pool_small.reshape(S, G, N_pad), eyeG).reshape(S, G, M)

    # --- stacked features & block-diagonal adjacency (bf16 MXU operands) ----
    x_p = _pad_axis(_pad_axis(_pad_axis(x_b.astype(f32), 0, B_pad), 1, N_pad), 2, F_pad)
    x_p = x_p.reshape(S, M, F_pad).astype(bf16)

    adj_p = _pad_axis(_pad_axis(_pad_axis(adj_b.astype(f32), 0, B_pad), 1, N_pad),
                      2, N_pad)
    adj_bd = jnp.einsum('sgij,gh->sgihj',
                        adj_p.reshape(S, G, N_pad, N_pad), eyeG)
    adj_bd = adj_bd.reshape(S, M, M).astype(bf16)

    # --- weights (bf16 for the MXU) and fused constants (f32) ---------------
    w1 = _pad_axis(_pad_axis(params['w1'].astype(f32), 0, F_pad), 1, H_pad).astype(bf16)
    w2 = _pad_axis(_pad_axis(params['w2'].astype(f32), 0, H_pad), 1, H_pad)
    w3 = _pad_axis(_pad_axis(params['w3'].astype(f32), 0, H_pad), 1, H_pad)
    proto = params['proto'].astype(f32)                               # [P, H]
    protoT = _pad_axis(_pad_axis(proto.T, 0, H_pad), 1, P_pad)        # [H_pad, P_pad]
    wcat = jnp.concatenate([w2, w3, protoT], axis=1).astype(bf16)     # [H_pad, 2H+P]

    b1 = _pad_axis(params['b1'].astype(f32)[None, :], 1, H_pad)
    b2 = _pad_axis(params['b2'].astype(f32)[None, :], 1, H_pad)
    b3 = _pad_axis(params['b3'].astype(f32)[None, :], 1, H_pad)
    p_sq = _pad_axis(jnp.sum(proto * proto, axis=1)[None, :], 1, P_pad)
    consts = jnp.concatenate([b1, b2, b3, p_sq, cmask], axis=1)       # [1, 3H+P+C]

    W_ROW = H_pad + P_pad + 2 * C_pad

    def step3(shape2):      # per-step block (leading step dim squeezed)
        return pl.BlockSpec((None,) + shape2, lambda s: (s, 0, 0))

    def const2(shape2):     # VMEM-resident across grid steps
        return pl.BlockSpec(shape2, lambda s: (0, 0))

    kernel = functools.partial(_gnn_block_kernel,
                               H_pad=H_pad, P_pad=P_pad, C_pad=C_pad)

    node_emb, rows = pl.pallas_call(
        kernel,
        out_shape=(jax.ShapeDtypeStruct((S, M, H_pad), bf16),   # emb1 (bf16)
                   jax.ShapeDtypeStruct((S, G, W_ROW), f32)),   # emb2|mind|logits|prob
        grid=(S,),
        in_specs=[
            step3((M, F_pad)),                          # x (G stacked graphs)
            step3((M, M)),                              # block-diagonal adjacency
            step3((G, M)),                              # mean-readout rows
            const2((F_pad, H_pad)),                     # w1
            const2((H_pad, 2 * H_pad + P_pad)),         # w2 | w3 | proto^T
            const2((P_pad, C_pad)),                     # last_layer^T
            const2((1, 3 * H_pad + P_pad + C_pad)),     # b1|b2|b3| |p|^2 |class-mask
        ],
        out_specs=(
            step3((M, H_pad)),
            step3((G, W_ROW)),
        ),
        compiler_params=pltpu.CompilerParams(
            dimension_semantics=("parallel",)),          # graph-group steps split across TCs
    )(x_p, adj_bd, pool, w1, wcat, lastwT, consts)

    # --- strip padding back to the module's shapes ---------------------------
    node_emb = node_emb.reshape(B_pad, N_pad, H_pad)[:B, :Nmax, :H]
    nmask = jnp.arange(Nmax)[None, :] < node_counts[:, None]
    emb1 = jnp.where(nmask[:, :, None], node_emb, jnp.zeros_like(node_emb))
    emb1 = emb1.astype(node_emb_dtype)

    rows = rows.reshape(B_pad, W_ROW)[:B]
    emb2 = rows[:, :H]
    min_d = rows[:, H_pad:H_pad + P]
    logits = rows[:, H_pad + P_pad:H_pad + P_pad + C]
    prob = rows[:, H_pad + P_pad + C_pad:H_pad + P_pad + C_pad + C]
    return logits, prob, emb1, emb2, min_d


# ---------------------------------------------------------------------------
# Synthetic parameters (ProtGNN GCNNet shapes) + pure-JAX reference
# ---------------------------------------------------------------------------
def init_params(key, input_dim, hidden_dim, output_dim, num_prototypes_per_class):
    P = output_dim * num_prototypes_per_class
    ks = jax.random.split(key, 8)

    def glorot(k, shape):
        s = jnp.sqrt(6.0 / (shape[0] + shape[1]))
        return jax.random.uniform(k, shape, jnp.float32, -s, s)

    return {
        'w1': glorot(ks[0], (input_dim, hidden_dim)),
        'b1': jnp.zeros((hidden_dim,), jnp.float32),
        'w2': glorot(ks[1], (hidden_dim, hidden_dim)),
        'b2': jnp.zeros((hidden_dim,), jnp.float32),
        'w3': glorot(ks[2], (hidden_dim, hidden_dim)),
        'b3': jnp.zeros((hidden_dim,), jnp.float32),
        # prototype_vectors ~ torch.rand -> U[0,1)
        'proto': jax.random.uniform(ks[3], (P, hidden_dim), jnp.float32),
        # last_layer: Linear(P, output_dim, bias=False)
        'last_w': glorot(ks[4], (output_dim, P)),
    }


def _reference_forward(x_b, adj_b, node_counts, params):
    """Dense f32 reference of GnnNets.forward (for a loose correctness check)."""
    def gcn(h, w, b):
        return jax.nn.relu(jnp.einsum('bnm,bmh->bnh', adj_b, h @ w) + b)
    h1 = gcn(x_b, params['w1'], params['b1'])
    h2 = gcn(h1, params['w2'], params['b2'])
    h3 = gcn(h2, params['w3'], params['b3'])
    nmask = (jnp.arange(x_b.shape[1])[None, :] < node_counts[:, None]).astype(jnp.float32)
    emb1 = h3 * nmask[:, :, None]
    emb2 = jnp.sum(emb1, axis=1) / node_counts[:, None].astype(jnp.float32)
    proto = params['proto']
    xp = emb2 @ proto.T
    dist = (-2.0 * xp + jnp.sum(emb2 ** 2, axis=1, keepdims=True)
            + jnp.sum(proto ** 2, axis=1)[None, :])
    sim = jnp.log((dist + 1.0) / (dist + EPS))
    logits = sim @ params['last_w'].T
    prob = jax.nn.softmax(logits, axis=-1)
    return logits, prob, emb1, emb2, dist


def _close(a, b, name, rtol, atol):
    a = jnp.asarray(a, jnp.float32)
    b = jnp.asarray(b, jnp.float32)
    err = float(jnp.max(jnp.abs(a - b)))
    ok = bool(jnp.all(jnp.abs(a - b) <= atol + rtol * jnp.abs(b)))
    assert ok, f"{name} mismatch: max abs err {err}"


if __name__ == "__main__":
    # 2 graphs, 16 node slots, 16 input feats, 32 hidden, 4 classes, 4 protos/class.
    B, N_PER, F, H, C, PPC = 2, 16, 16, 32, 4, 4

    key = jax.random.PRNGKey(0)
    kx, ka, kp = jax.random.split(key, 3)

    # graph 1 uses only 12 of its 16 node slots (exercises pooling / emb1 masking)
    node_counts = jnp.array([N_PER, N_PER - 4], jnp.int32)
    nmask = (jnp.arange(N_PER)[None, :] < node_counts[:, None]).astype(jnp.float32)

    x_b = jax.random.normal(kx, (B, N_PER, F), jnp.float32) * nmask[:, :, None]

    # random symmetric adjacency with self-loops on valid nodes, then D^-1/2(A+I)D^-1/2
    a = (jax.random.uniform(ka, (B, N_PER, N_PER)) < 0.2).astype(jnp.float32)
    a = jnp.minimum(jnp.maximum(a, jnp.swapaxes(a, 1, 2))
                    + jnp.eye(N_PER, dtype=jnp.float32)[None], 1.0)
    a = a * nmask[:, :, None] * nmask[:, None, :]
    deg = jnp.sum(a, axis=2)
    dinv = jnp.where(deg > 0, 1.0 / jnp.sqrt(jnp.maximum(deg, 1e-12)), 0.0)
    adj_b = a * dinv[:, :, None] * dinv[:, None, :]

    params = init_params(kp, F, H, C, PPC)

    logits, prob, emb1, emb2, min_d = gnn_nets_forward(x_b, adj_b, node_counts, params)
    jax.block_until_ready((logits, prob, emb1, emb2, min_d))

    # loose-tolerance check vs a pure-f32 reference (kernel uses bf16 MXU operands
    # with f32 accumulation, so expect ~1e-2-level relative deviation)
    r_logits, r_prob, r_emb1, r_emb2, r_mind = _reference_forward(
        x_b, adj_b, node_counts, params)
    _close(emb2, r_emb2, "emb2", rtol=0.1, atol=0.05)
    _close(emb1, r_emb1, "emb1", rtol=0.1, atol=0.05)
    _close(min_d, r_mind, "min_distances", rtol=0.1, atol=0.5)
    _close(logits, r_logits, "logits", rtol=0.15, atol=0.1)
    _close(prob, r_prob, "prob", rtol=0.15, atol=0.05)

    # protgnn_plus branch (logits straight from the provided similarity)
    sim = jax.random.normal(jax.random.PRNGKey(1), (B, C * PPC), jnp.float32)
    pl_logits, pl_prob, _, _, _ = gnn_nets_forward(
        x_b, adj_b, node_counts, params, protgnn_plus=True, similarity=sim)
    jax.block_until_ready((pl_logits, pl_prob))

    assert logits.shape == (B, C) and prob.shape == (B, C)
    assert emb1.shape == (B, N_PER, H) and emb2.shape == (B, H)
    assert min_d.shape == (B, C * PPC)
    assert pl_logits.shape == (B, C) and pl_prob.shape == (B, C)
    assert bool(jnp.all(jnp.isfinite(logits))) and bool(jnp.all(jnp.isfinite(prob)))
    assert bool(jnp.allclose(jnp.sum(prob, axis=-1), 1.0, atol=1e-3))
    print("KERNEL_OK")
</pallas_src>

<mosaic_0001>
module attributes {stable_mosaic.version = 11 : i64} {
  func.func @_gnn_block_kernel(%arg0: i32, %arg1: memref<1x128x128xbf16, #tpu.memory_space<vmem>>, %arg2: memref<1x128x128xbf16, #tpu.memory_space<vmem>>, %arg3: memref<1x8x128xf32, #tpu.memory_space<vmem>>, %arg4: memref<128x128xbf16, #tpu.memory_space<vmem>>, %arg5: memref<128x384xbf16, #tpu.memory_space<vmem>>, %arg6: memref<128x128xbf16, #tpu.memory_space<vmem>>, %arg7: memref<1x640xf32, #tpu.memory_space<vmem>>, %arg8: memref<1x128x128xbf16, #tpu.memory_space<vmem>>, %arg9: memref<1x8x512xf32, #tpu.memory_space<vmem>>) attributes {dimension_semantics = [#tpu.dimension_semantics<parallel>], iteration_bounds = array<i64: 1>, scalar_prefetch = 0 : i64, scratch_operands = 0 : i64, tpu.core_type = #tpu.core_type<tc>, window_params = [{transform_indices = @transform_0, window_bounds = array<i64: 1, 128, 128>}, {transform_indices = @transform_1, window_bounds = array<i64: 1, 128, 128>}, {transform_indices = @transform_2, window_bounds = array<i64: 1, 8, 128>}, {pipeline_mode = #tpu.pipeline_mode<synchronous>, transform_indices = @transform_3, window_bounds = array<i64: 128, 128>}, {pipeline_mode = #tpu.pipeline_mode<synchronous>, transform_indices = @transform_4, window_bounds = array<i64: 128, 384>}, {pipeline_mode = #tpu.pipeline_mode<synchronous>, transform_indices = @transform_5, window_bounds = array<i64: 128, 128>}, {pipeline_mode = #tpu.pipeline_mode<synchronous>, transform_indices = @transform_6, window_bounds = array<i64: 1, 640>}, {transform_indices = @transform_7, window_bounds = array<i64: 1, 128, 128>}, {transform_indices = @transform_8, window_bounds = array<i64: 1, 8, 512>}]} {
    %c0 = arith.constant 0 : index
    %c0_0 = arith.constant 0 : index
    %c0_1 = arith.constant 0 : index
    %0 = vector.load %arg2[%c0, %c0_0, %c0_1] : memref<1x128x128xbf16, #tpu.memory_space<vmem>>, vector<1x128x128xbf16>
    %1 = vector.shape_cast %0 : vector<1x128x128xbf16> to vector<128x128xbf16>
    %c0_2 = arith.constant 0 : index
    %c0_3 = arith.constant 0 : index
    %2 = vector.load %arg7[%c0_2, %c0_3] : memref<1x640xf32, #tpu.memory_space<vmem>>, vector<1x128xf32>
    %c0_4 = arith.constant 0 : index
    %c128 = arith.constant 128 : index
    %3 = vector.load %arg7[%c0_4, %c128] : memref<1x640xf32, #tpu.memory_space<vmem>>, vector<1x128xf32>
    %c0_5 = arith.constant 0 : index
    %c256 = arith.constant 256 : index
    %4 = vector.load %arg7[%c0_5, %c256] : memref<1x640xf32, #tpu.memory_space<vmem>>, vector<1x128xf32>
    %c0_6 = arith.constant 0 : index
    %c384 = arith.constant 384 : index
    %5 = vector.load %arg7[%c0_6, %c384] : memref<1x640xf32, #tpu.memory_space<vmem>>, vector<1x128xf32>
    %c0_7 = arith.constant 0 : index
    %c512 = arith.constant 512 : index
    %6 = vector.load %arg7[%c0_7, %c512] : memref<1x640xf32, #tpu.memory_space<vmem>>, vector<1x128xf32>
    %c0_8 = arith.constant 0 : index
    %c0_9 = arith.constant 0 : index
    %c0_10 = arith.constant 0 : index
    %7 = vector.load %arg1[%c0_8, %c0_9, %c0_10] : memref<1x128x128xbf16, #tpu.memory_space<vmem>>, vector<1x128x128xbf16>
    %8 = vector.shape_cast %7 : vector<1x128x128xbf16> to vector<128x128xbf16>
    %c0_11 = arith.constant 0 : index
    %c0_12 = arith.constant 0 : index
    %9 = vector.load %arg4[%c0_11, %c0_12] : memref<128x128xbf16, #tpu.memory_space<vmem>>, vector<128x128xbf16>
    %cst = arith.constant dense<0.000000e+00> : vector<128x128xf32>
    %10 = tpu.matmul %8, %9, %cst {dimension_numbers = #tpu.dot_dimension_numbers<[1], [0], [0], [1], [0, 0, 1, 1], [], []>} : vector<128x128xbf16>, vector<128x128xbf16>, vector<128x128xf32> -> vector<128x128xf32>
    %11 = arith.truncf %10 : vector<128x128xf32> to vector<128x128xbf16>
    %cst_13 = arith.constant dense<0.000000e+00> : vector<128x128xf32>
    %12 = tpu.matmul %1, %11, %cst_13 {dimension_numbers = #tpu.dot_dimension_numbers<[1], [0], [0], [1], [0, 0, 1, 1], [], []>} : vector<128x128xbf16>, vector<128x128xbf16>, vector<128x128xf32> -> vector<128x128xf32>
    %13 = vector.broadcast %2 : vector<1x128xf32> to vector<128x128xf32>
    %14 = arith.addf %12, %13 : vector<128x128xf32>
    %cst_14 = arith.constant 0.000000e+00 : f32
    %15 = vector.broadcast %cst_14 : f32 to vector<128x128xf32>
    %16 = arith.maximumf %14, %15 : vector<128x128xf32>
    %17 = arith.truncf %16 : vector<128x128xf32> to vector<128x128xbf16>
    %c0_15 = arith.constant 0 : index
    %c0_16 = arith.constant 0 : index
    %18 = vector.load %arg5[%c0_15, %c0_16] : memref<128x384xbf16, #tpu.memory_space<vmem>>, vector<128x128xbf16>
    %cst_17 = arith.constant dense<0.000000e+00> : vector<128x128xf32>
    %19 = tpu.matmul %17, %18, %cst_17 {dimension_numbers = #tpu.dot_dimension_numbers<[1], [0], [0], [1], [0, 0, 1, 1], [], []>} : vector<128x128xbf16>, vector<128x128xbf16>, vector<128x128xf32> -> vector<128x128xf32>
    %20 = arith.truncf %19 : vector<128x128xf32> to vector<128x128xbf16>
    %cst_18 = arith.constant dense<0.000000e+00> : vector<128x128xf32>
    %21 = tpu.matmul %1, %20, %cst_18 {dimension_numbers = #tpu.dot_dimension_numbers<[1], [0], [0], [1], [0, 0, 1, 1], [], []>} : vector<128x128xbf16>, vector<128x128xbf16>, vector<128x128xf32> -> vector<128x128xf32>
    %22 = vector.broadcast %3 : vector<1x128xf32> to vector<128x128xf32>
    %23 = arith.addf %21, %22 : vector<128x128xf32>
    %cst_19 = arith.constant 0.000000e+00 : f32
    %24 = vector.broadcast %cst_19 : f32 to vector<128x128xf32>
    %25 = arith.maximumf %23, %24 : vector<128x128xf32>
    %26 = arith.truncf %25 : vector<128x128xf32> to vector<128x128xbf16>
    %c0_20 = arith.constant 0 : index
    %c128_21 = arith.constant 128 : index
    %27 = vector.load %arg5[%c0_20, %c128_21] : memref<128x384xbf16, #tpu.memory_space<vmem>>, vector<128x128xbf16>
    %cst_22 = arith.constant dense<0.000000e+00> : vector<128x128xf32>
    %28 = tpu.matmul %26, %27, %cst_22 {dimension_numbers = #tpu.dot_dimension_numbers<[1], [0], [0], [1], [0, 0, 1, 1], [], []>} : vector<128x128xbf16>, vector<128x128xbf16>, vector<128x128xf32> -> vector<128x128xf32>
    %29 = arith.truncf %28 : vector<128x128xf32> to vector<128x128xbf16>
    %cst_23 = arith.constant dense<0.000000e+00> : vector<128x128xf32>
    %30 = tpu.matmul %1, %29, %cst_23 {dimension_numbers = #tpu.dot_dimension_numbers<[1], [0], [0], [1], [0, 0, 1, 1], [], []>} : vector<128x128xbf16>, vector<128x128xbf16>, vector<128x128xf32> -> vector<128x128xf32>
    %31 = vector.broadcast %4 : vector<1x128xf32> to vector<128x128xf32>
    %32 = arith.addf %30, %31 : vector<128x128xf32>
    %cst_24 = arith.constant 0.000000e+00 : f32
    %33 = vector.broadcast %cst_24 : f32 to vector<128x128xf32>
    %34 = arith.maximumf %32, %33 : vector<128x128xf32>
    %35 = arith.truncf %34 : vector<128x128xf32> to vector<128x128xbf16>
    %c0_25 = arith.constant 0 : index
    %c0_26 = arith.constant 0 : index
    %c0_27 = arith.constant 0 : index
    %36 = vector.load %arg8[%c0_25, %c0_26, %c0_27] : memref<1x128x128xbf16, #tpu.memory_space<vmem>>, vector<1x128x128xbf16>
    %37 = vector.shape_cast %36 : vector<1x128x128xbf16> to vector<128x128xbf16>
    %38 = vector.shape_cast %35 : vector<128x128xbf16> to vector<1x128x128xbf16>
    tpu.vector_store %arg8[%c0_25, %c0_26, %c0_27], %38 {strides = array<i32>} : memref<1x128x128xbf16, #tpu.memory_space<vmem>>, vector<1x128x128xbf16>,
    %c0_28 = arith.constant 0 : index
    %c0_29 = arith.constant 0 : index
    %c0_30 = arith.constant 0 : index
    %39 = vector.load %arg3[%c0_28, %c0_29, %c0_30] : memref<1x8x128xf32, #tpu.memory_space<vmem>>, vector<1x8x128xf32>
    %40 = vector.shape_cast %39 : vector<1x8x128xf32> to vector<8x128xf32>
    %cst_31 = arith.constant dense<0.000000e+00> : vector<8x128xf32>
    %41 = tpu.matmul %40, %34, %cst_31 {dimension_numbers = #tpu.dot_dimension_numbers<[1], [0], [0], [1], [0, 0, 1, 1], [], []>} : vector<8x128xf32>, vector<128x128xf32>, vector<8x128xf32> -> vector<8x128xf32>
    %c0_32 = arith.constant 0 : index
    %c0_33 = arith.constant 0 : index
    %c0_34 = arith.constant 0 : index
    %42 = vector.load %arg9[%c0_32, %c0_33, %c0_34] : memref<1x8x512xf32, #tpu.memory_space<vmem>>, vector<1x8x128xf32>
    %43 = vector.shape_cast %42 : vector<1x8x128xf32> to vector<8x128xf32>
    %44 = vector.shape_cast %41 : vector<8x128xf32> to vector<1x8x128xf32>
    tpu.vector_store %arg9[%c0_32, %c0_33, %c0_34], %44 {strides = array<i32>} : memref<1x8x512xf32, #tpu.memory_space<vmem>>, vector<1x8x128xf32>,
    %c0_35 = arith.constant 0 : index
    %c256_36 = arith.constant 256 : index
    %45 = vector.load %arg5[%c0_35, %c256_36] : memref<128x384xbf16, #tpu.memory_space<vmem>>, vector<128x128xbf16>
    %46 = arith.truncf %41 : vector<8x128xf32> to vector<8x128xbf16>
    %cst_37 = arith.constant dense<0.000000e+00> : vector<8x128xf32>
    %47 = tpu.matmul %46, %45, %cst_37 {dimension_numbers = #tpu.dot_dimension_numbers<[1], [0], [0], [1], [0, 0, 1, 1], [], []>} : vector<8x128xbf16>, vector<128x128xbf16>, vector<8x128xf32> -> vector<8x128xf32>
    %48 = arith.mulf %41, %41 : vector<8x128xf32>
    %cst_38 = arith.constant dense<0.000000e+00> : vector<8xf32>
    %49 = vector.multi_reduction <add>, %48, %cst_38 [1] : vector<8x128xf32> to vector<8xf32>
    %50 = vector.shape_cast %49 : vector<8xf32> to vector<8x1xf32>
    %cst_39 = arith.constant -2.000000e+00 : f32
    %51 = vector.broadcast %cst_39 : f32 to vector<8x128xf32>
    %52 = arith.mulf %51, %47 : vector<8x128xf32>
    %53 = vector.broadcast %50 : vector<8x1xf32> to vector<8x128xf32>
    %54 = arith.addf %52, %53 : vector<8x128xf32>
    %55 = vector.broadcast %5 : vector<1x128xf32> to vector<8x128xf32>
    %56 = arith.addf %54, %55 : vector<8x128xf32>
    %c0_40 = arith.constant 0 : index
    %c0_41 = arith.constant 0 : index
    %c128_42 = arith.constant 128 : index
    %57 = vector.load %arg9[%c0_40, %c0_41, %c128_42] : memref<1x8x512xf32, #tpu.memory_space<vmem>>, vector<1x8x128xf32>
    %58 = vector.shape_cast %57 : vector<1x8x128xf32> to vector<8x128xf32>
    %59 = vector.shape_cast %56 : vector<8x128xf32> to vector<1x8x128xf32>
    tpu.vector_store %arg9[%c0_40, %c0_41, %c128_42], %59 {strides = array<i32>} : memref<1x8x512xf32, #tpu.memory_space<vmem>>, vector<1x8x128xf32>,
    %cst_43 = arith.constant 0.000000e+00 : f32
    %60 = vector.broadcast %cst_43 : f32 to vector<8x128xf32>
    %61 = arith.maximumf %56, %60 : vector<8x128xf32>
    %cst_44 = arith.constant 1.000000e+00 : f32
    %62 = vector.broadcast %cst_44 : f32 to vector<8x128xf32>
    %63 = arith.addf %61, %62 : vector<8x128xf32>
    %cst_45 = arith.constant 9.99999974E-5 : f32
    %64 = vector.broadcast %cst_45 : f32 to vector<8x128xf32>
    %65 = arith.addf %61, %64 : vector<8x128xf32>
    %66 = arith.divf %63, %65 : vector<8x128xf32>
    %67 = math.log %66 : vector<8x128xf32>
    %68 = arith.truncf %67 : vector<8x128xf32> to vector<8x128xbf16>
    %c0_46 = arith.constant 0 : index
    %c0_47 = arith.constant 0 : index
    %69 = vector.load %arg6[%c0_46, %c0_47] : memref<128x128xbf16, #tpu.memory_space<vmem>>, vector<128x128xbf16>
    %cst_48 = arith.constant dense<0.000000e+00> : vector<8x128xf32>
    %70 = tpu.matmul %68, %69, %cst_48 {dimension_numbers = #tpu.dot_dimension_numbers<[1], [0], [0], [1], [0, 0, 1, 1], [], []>} : vector<8x128xbf16>, vector<128x128xbf16>, vector<8x128xf32> -> vector<8x128xf32>
    %c0_49 = arith.constant 0 : index
    %c0_50 = arith.constant 0 : index
    %c256_51 = arith.constant 256 : index
    %71 = vector.load %arg9[%c0_49, %c0_50, %c256_51] : memref<1x8x512xf32, #tpu.memory_space<vmem>>, vector<1x8x128xf32>
    %72 = vector.shape_cast %71 : vector<1x8x128xf32> to vector<8x128xf32>
    %73 = vector.shape_cast %70 : vector<8x128xf32> to vector<1x8x128xf32>
    tpu.vector_store %arg9[%c0_49, %c0_50, %c256_51], %73 {strides = array<i32>} : memref<1x8x512xf32, #tpu.memory_space<vmem>>, vector<1x8x128xf32>,
    %74 = vector.broadcast %6 : vector<1x128xf32> to vector<8x128xf32>
    %75 = arith.addf %70, %74 : vector<8x128xf32>
    %cst_52 = arith.constant dense<0xFF800000> : vector<8xf32>
    %76 = vector.multi_reduction <maximumf>, %75, %cst_52 [1] : vector<8x128xf32> to vector<8xf32>
    %77 = vector.shape_cast %76 : vector<8xf32> to vector<8x1xf32>
    %78 = vector.broadcast %77 : vector<8x1xf32> to vector<8x128xf32>
    %79 = arith.subf %75, %78 : vector<8x128xf32>
    %80 = math.exp %79 : vector<8x128xf32>
    %cst_53 = arith.constant dense<0.000000e+00> : vector<8xf32>
    %81 = vector.multi_reduction <add>, %80, %cst_53 [1] : vector<8x128xf32> to vector<8xf32>
    %82 = vector.shape_cast %81 : vector<8xf32> to vector<8x1xf32>
    %83 = vector.broadcast %82 : vector<8x1xf32> to vector<8x128xf32>
    %84 = arith.divf %80, %83 : vector<8x128xf32>
    %c0_54 = arith.constant 0 : index
    %c0_55 = arith.constant 0 : index
    %c384_56 = arith.constant 384 : index
    %85 = vector.load %arg9[%c0_54, %c0_55, %c384_56] : memref<1x8x512xf32, #tpu.memory_space<vmem>>, vector<1x8x128xf32>
    %86 = vector.shape_cast %85 : vector<1x8x128xf32> to vector<8x128xf32>
    %87 = vector.shape_cast %84 : vector<8x128xf32> to vector<1x8x128xf32>
    tpu.vector_store %arg9[%c0_54, %c0_55, %c384_56], %87 {strides = array<i32>} : memref<1x8x512xf32, #tpu.memory_space<vmem>>, vector<1x8x128xf32>,
    return
  }
  func.func @transform_0(%arg0: i32) -> (i32, i32, i32) {
    %c0_i32 = arith.constant 0 : i32
    %c0_i32_0 = arith.constant 0 : i32
    %c0_i32_1 = arith.constant 0 : i32
    return %arg0, %c0_i32, %c0_i32_0 : i32, i32, i32
  }
  func.func @transform_1(%arg0: i32) -> (i32, i32, i32) {
    %c0_i32 = arith.constant 0 : i32
    %c0_i32_0 = arith.constant 0 : i32
    %c0_i32_1 = arith.constant 0 : i32
    return %arg0, %c0_i32, %c0_i32_0 : i32, i32, i32
  }
  func.func @transform_2(%arg0: i32) -> (i32, i32, i32) {
    %c0_i32 = arith.constant 0 : i32
    %c0_i32_0 = arith.constant 0 : i32
    %c0_i32_1 = arith.constant 0 : i32
    return %arg0, %c0_i32, %c0_i32_0 : i32, i32, i32
  }
  func.func @transform_3(%arg0: i32) -> (i32, i32) {
    %c0_i32 = arith.constant 0 : i32
    %c0_i32_0 = arith.constant 0 : i32
    %c0_i32_1 = arith.constant 0 : i32
    return %c0_i32, %c0_i32_0 : i32, i32
  }
  func.func @transform_4(%arg0: i32) -> (i32, i32) {
    %c0_i32 = arith.constant 0 : i32
    %c0_i32_0 = arith.constant 0 : i32
    %c0_i32_1 = arith.constant 0 : i32
    return %c0_i32, %c0_i32_0 : i32, i32
  }
  func.func @transform_5(%arg0: i32) -> (i32, i32) {
    %c0_i32 = arith.constant 0 : i32
    %c0_i32_0 = arith.constant 0 : i32
    %c0_i32_1 = arith.constant 0 : i32
    return %c0_i32, %c0_i32_0 : i32, i32
  }
  func.func @transform_6(%arg0: i32) -> (i32, i32) {
    %c0_i32 = arith.constant 0 : i32
    %c0_i32_0 = arith.constant 0 : i32
    %c0_i32_1 = arith.constant 0 : i32
    return %c0_i32, %c0_i32_0 : i32, i32
  }
  func.func @transform_7(%arg0: i32) -> (i32, i32, i32) {
    %c0_i32 = arith.constant 0 : i32
    %c0_i32_0 = arith.constant 0 : i32
    %c0_i32_1 = arith.constant 0 : i32
    return %arg0, %c0_i32, %c0_i32_0 : i32, i32, i32
  }
  func.func @transform_8(%arg0: i32) -> (i32, i32, i32) {
    %c0_i32 = arith.constant 0 : i32
    %c0_i32_0 = arith.constant 0 : i32
    %c0_i32_1 = arith.constant 0 : i32
    return %arg0, %c0_i32, %c0_i32_0 : i32, i32, i32
  }
}

</mosaic_0001>

<llo_original>
// kernel: tpu_custom_call.1
$region0: #{tpu_custom_call.1}
  #allocation0 [shape = 'u32[]', space=smem, size = 0x4, offset = 0x4, fixed_abs, tag = 'smem constant byte address 0x4 - core index']
  #allocation1 [shape = 'u32[144,128]{1,0:T(1,128)}', space=vmem, size = 0x12000, scoped, tag = 'internal scratch']
  %s0 = inlined_call_operand.hbm [shape: bf16[1,128,128], index: 0, kind: input, shape index: {}]
  %s1 = inlined_call_operand.hbm [shape: bf16[1,128,128], index: 1, kind: input, shape index: {}]
  %s2 = inlined_call_operand.hbm [shape: f32[1,8,128], index: 2, kind: input, shape index: {}]
  %s3 = inlined_call_operand.hbm [shape: bf16[128,128], index: 3, kind: input, shape index: {}]
  %s4 = inlined_call_operand.hbm [shape: bf16[128,384], index: 4, kind: input, shape index: {}]
  %s5 = inlined_call_operand.hbm [shape: bf16[128,128], index: 5, kind: input, shape index: {}]
  %s6 = inlined_call_operand.vmem [shape: f32[1,640], index: 6, kind: input, shape index: {}]
  %s7 = inlined_call_operand.hbm [shape: bf16[1,128,128], index: 7, kind: output, shape index: {0}]
  %s8 = inlined_call_operand.hbm [shape: f32[1,8,512], index: 8, kind: output, shape index: {1}]
  %9 = xla_tuple %s7, %s8
  %s10 = sld [smem:[#allocation0]]
  $region70: #{tpu_custom_call.1} parent=0
    _
  %s12 = ssub.s32 1, %s10
  %s13 = scalar_select 0, %s12, %s10
  $region1: #{tpu_custom_call.1} parent=0
    #allocation2 [shape = 'u8[32768]{0}', space=vmem, size = 0x8000, scoped, tag = 'input window, operand 0, single buffered']
    #allocation3 [shape = 's32[1]{0}', space=sflag, size = 0x4, scoped, tag = 'scoped memory for tpu_custom_call.1']
    #allocation4 [shape = 's32[1]{0}', space=sflag, size = 0x4, scoped, tag = 'scoped memory for tpu_custom_call.1']
    #allocation5 [shape = 'u8[32768]{0}', space=vmem, size = 0x8000, scoped, tag = 'input window, operand 1, single buffered']
    #allocation6 [shape = 's32[1]{0}', space=sflag, size = 0x4, scoped, tag = 'scoped memory for tpu_custom_call.1']
    #allocation7 [shape = 'u8[4096]{0}', space=vmem, size = 0x1000, scoped, tag = 'input window, operand 2, single buffered']
    #allocation8 [shape = 'u8[32768]{0}', space=vmem, size = 0x8000, scoped, tag = 'input window, operand 3, single buffered']
    #allocation9 [shape = 's32[1]{0}', space=sflag, size = 0x4, scoped, tag = 'scoped memory for tpu_custom_call.1']
    #allocation10 [shape = 'u8[98304]{0}', space=vmem, size = 0x18000, scoped, tag = 'input window, operand 4, single buffered']
    #allocation11 [shape = 'u8[32768]{0}', space=vmem, size = 0x8000, scoped, tag = 'input window, operand 5, single buffered']
    #allocation12 [shape = 's32[1]{0}', space=sflag, size = 0x4, scoped, tag = 'scoped memory for tpu_custom_call.1']
    #allocation13 [shape = 'u8[32768]{0}', space=vmem, size = 0x8000, scoped, tag = 'output window, operand 0, single buffered']
    #allocation14 [shape = 'u8[16384]{0}', space=vmem, size = 0x4000, scoped, tag = 'output window, operand 1, single buffered']
    #allocation15 [shape = 's32[1]{0}', space=sflag, size = 0x4, scoped, tag = 'scoped memory for tpu_custom_call.1']
    %14 = vsyncpa [#allocation3], 0
    %15 = vsyncpa [#allocation6], 0
    %16 = vsyncpa [#allocation9], 0
    %17 = vsyncpa [#allocation12], 0
    %18 = vsyncpa [#allocation4], 0
    %19 = vsyncpa [#allocation15], 0
    // Predicated region
    $region2: #{tpu_custom_call.1} parent=1 // pred_check
      _
    $region3: #{tpu_custom_call.1} parent=1 // pred_check_branch
      %21 = sbr.rel (0) target = $region5
    $region4: #{tpu_custom_call.1} parent=1 // pred_region
      %s23 = ssub.s32 1024, 1024
      %24 = vsyncadd [#allocation3], %s23
      %s25 = sshll.u32 [#allocation2], 4
      %s26 = int_to_ptr.vmem [resolvable:$true] %s25
      %31 = dma.hbm_to_vmem [thread:$0]  %s0, 1024, %s26, [#allocation3], 64, 64, 4
    $region5: #{tpu_custom_call.1} parent=1 // pred_fallthru
      _
    // Predicated region
    $region6: #{tpu_custom_call.1} parent=1 // pred_check
      _
    $region7: #{tpu_custom_call.1} parent=1 // pred_check_branch
      %33 = sbr.rel (0) target = $region9
    $region8: #{tpu_custom_call.1} parent=1 // pred_region
      %s35 = ssub.s32 1024, 1024
      %36 = vsyncadd [#allocation6], %s35
      %s37 = sshll.u32 [#allocation5], 4
      %s38 = int_to_ptr.vmem [resolvable:$true] %s37
      %43 = dma.hbm_to_vmem [thread:$0]  %s1, 1024, %s38, [#allocation6], 64, 64, 4
    $region9: #{tpu_custom_call.1} parent=1 // pred_fallthru
      _
    // Predicated region
    $region10: #{tpu_custom_call.1} parent=1 // pred_check
      _
    $region11: #{tpu_custom_call.1} parent=1 // pred_check_branch
      %45 = sbr.rel (0) target = $region13
    $region12: #{tpu_custom_call.1} parent=1 // pred_region
      %s47 = ssub.s32 128, 128
      %48 = vsyncadd [#allocation6], %s47
      %s50 = sshll.u32 [#allocation7], 4
      %s51 = int_to_ptr.vmem [resolvable:$true] %s50
      %53 = dma.hbm_to_vmem [thread:$0]  %s2, 128, %s51, [#allocation6]
    $region13: #{tpu_custom_call.1} parent=1 // pred_fallthru
      _
    // Predicated region
    $region14: #{tpu_custom_call.1} parent=1 // pred_check
      _
    $region15: #{tpu_custom_call.1} parent=1 // pred_check_branch
      %55 = sbr.rel (0) target = $region17
    $region16: #{tpu_custom_call.1} parent=1 // pred_region
      %s57 = ssub.s32 1024, 1024
      %58 = vsyncadd [#allocation9], %s57
      %s59 = sshll.u32 [#allocation8], 4
      %s60 = int_to_ptr.vmem [resolvable:$true] %s59
      %65 = dma.hbm_to_vmem [thread:$0]  %s3, 1024, %s60, [#allocation9], 64, 64, 4
    $region17: #{tpu_custom_call.1} parent=1 // pred_fallthru
      _
    // Predicated region
    $region18: #{tpu_custom_call.1} parent=1 // pred_check
      _
    $region19: #{tpu_custom_call.1} parent=1 // pred_check_branch
      %67 = sbr.rel (0) target = $region21
    $region20: #{tpu_custom_call.1} parent=1 // pred_region
      %s69 = ssub.s32 3072, 3072
      %70 = vsyncadd [#allocation9], %s69
      %s71 = sshll.u32 [#allocation10], 4
      %s72 = int_to_ptr.vmem [resolvable:$true] %s71
      %77 = dma.hbm_to_vmem [thread:$0]  %s4, 3072, %s72, [#allocation9], 192, 192, 12
    $region21: #{tpu_custom_call.1} parent=1 // pred_fallthru
      _
    // Predicated region
    $region22: #{tpu_custom_call.1} parent=1 // pred_check
      _
    $region23: #{tpu_custom_call.1} parent=1 // pred_check_branch
      %79 = sbr.rel (0) target = $region25
    $region24: #{tpu_custom_call.1} parent=1 // pred_region
      %s81 = ssub.s32 1024, 1024
      %82 = vsyncadd [#allocation12], %s81
      %s83 = sshll.u32 [#allocation11], 4
      %s84 = int_to_ptr.vmem [resolvable:$true] %s83
      %89 = dma.hbm_to_vmem [thread:$0]  %s5, 1024, %s84, [#allocation12], 64, 64, 4
    $region25: #{tpu_custom_call.1} parent=1 // pred_fallthru
      _
    // Predicated region
    $region26: #{tpu_custom_call.1} parent=1 // pred_check
      _
    $region27: #{tpu_custom_call.1} parent=1 // pred_check_branch
      %91 = sbr.rel (0) target = $region29
    $region28: #{tpu_custom_call.1} parent=1 // pred_region
      _
    $region29: #{tpu_custom_call.1} parent=1 // pred_fallthru
      _
    // Predicated region
    $region30: #{tpu_custom_call.1} parent=1 // pred_check
      _
    $region31: #{tpu_custom_call.1} parent=1 // pred_check_branch
      %93 = sbr.rel (0) target = $region33
    $region32: #{tpu_custom_call.1} parent=1 // pred_region
      %94 = dma.done [#allocation3], 1024
    $region33: #{tpu_custom_call.1} parent=1 // pred_fallthru
      _
    // Predicated region
    $region34: #{tpu_custom_call.1} parent=1 // pred_check
      _
    $region35: #{tpu_custom_call.1} parent=1 // pred_check_branch
      %96 = sbr.rel (0) target = $region37
    $region36: #{tpu_custom_call.1} parent=1 // pred_region
      %97 = dma.done [#allocation6], 1024
    $region37: #{tpu_custom_call.1} parent=1 // pred_fallthru
      _
    // Predicated region
    $region38: #{tpu_custom_call.1} parent=1 // pred_check
      _
    $region39: #{tpu_custom_call.1} parent=1 // pred_check_branch
      %99 = sbr.rel (0) target = $region41
    $region40: #{tpu_custom_call.1} parent=1 // pred_region
      %100 = dma.done [#allocation6], 128
    $region41: #{tpu_custom_call.1} parent=1 // pred_fallthru
      _
    // Predicated region
    $region42: #{tpu_custom_call.1} parent=1 // pred_check
      _
    $region43: #{tpu_custom_call.1} parent=1 // pred_check_branch
      %102 = sbr.rel (0) target = $region45
    $region44: #{tpu_custom_call.1} parent=1 // pred_region
      %103 = dma.done [#allocation9], 1024
    $region45: #{tpu_custom_call.1} parent=1 // pred_fallthru
      _
    // Predicated region
    $region46: #{tpu_custom_call.1} parent=1 // pred_check
      _
    $region47: #{tpu_custom_call.1} parent=1 // pred_check_branch
      %105 = sbr.rel (0) target = $region49
    $region48: #{tpu_custom_call.1} parent=1 // pred_region
      %106 = dma.done [#allocation9], 3072
    $region49: #{tpu_custom_call.1} parent=1 // pred_fallthru
      _
    // Predicated region
    $region50: #{tpu_custom_call.1} parent=1 // pred_check
      _
    $region51: #{tpu_custom_call.1} parent=1 // pred_check_branch
      %108 = sbr.rel (0) target = $region53
    $region52: #{tpu_custom_call.1} parent=1 // pred_region
      %109 = dma.done [#allocation12], 1024
    $region53: #{tpu_custom_call.1} parent=1 // pred_fallthru
      _
    %v111 = vld [vmem:[#allocation5] sm:$0xf]
    %v112 = vld [vmem:[#allocation5 + $0x4] sm:$0xf]
    %v113 = vld [vmem:[#allocation5 + $0x8] sm:$0xf]
    %v114 = vld [vmem:[#allocation5 + $0xc] sm:$0xf]
    %v115 = vld [vmem:[#allocation5 + $0x10] sm:$0xf]
    %v116 = vld [vmem:[#allocation5 + $0x14] sm:$0xf]
    %v117 = vld [vmem:[#allocation5 + $0x18] sm:$0xf]
    %v118 = vld [vmem:[#allocation5 + $0x1c] sm:$0xf]
    %v119 = vld [vmem:[#allocation5 + $0x20] sm:$0xf]
    %v120 = vld [vmem:[#allocation5 + $0x24] sm:$0xf]
    %v121 = vld [vmem:[#allocation5 + $0x28] sm:$0xf]
    %v122 = vld [vmem:[#allocation5 + $0x2c] sm:$0xf]
    %v123 = vld [vmem:[#allocation5 + $0x30] sm:$0xf]
    %v124 = vld [vmem:[#allocation5 + $0x34] sm:$0xf]
    %v125 = vld [vmem:[#allocation5 + $0x38] sm:$0xf]
    %v126 = vld [vmem:[#allocation5 + $0x3c] sm:$0xf]
    %v127 = vld [vmem:[%s6] sm:$0x1]
    %v128 = vld [vmem:[%s6 + $0x1] sm:$0x1]
    %v129 = vld [vmem:[%s6 + $0x2] sm:$0x1]
    %v130 = vld [vmem:[%s6 + $0x3] sm:$0x1]
    %v131 = vld [vmem:[%s6 + $0x4] sm:$0x1]
    %v132 = vld [vmem:[#allocation2] sm:$0xf]
    %v133 = vld [vmem:[#allocation2 + $0x4] sm:$0xf]
    %v134 = vld [vmem:[#allocation2 + $0x8] sm:$0xf]
    %v135 = vld [vmem:[#allocation2 + $0xc] sm:$0xf]
    %v136 = vld [vmem:[#allocation2 + $0x10] sm:$0xf]
    %v137 = vld [vmem:[#allocation2 + $0x14] sm:$0xf]
    %v138 = vld [vmem:[#allocation2 + $0x18] sm:$0xf]
    %v139 = vld [vmem:[#allocation2 + $0x1c] sm:$0xf]
    %v140 = vld [vmem:[#allocation2 + $0x20] sm:$0xf]
    %v141 = vld [vmem:[#allocation2 + $0x24] sm:$0xf]
    %v142 = vld [vmem:[#allocation2 + $0x28] sm:$0xf]
    %v143 = vld [vmem:[#allocation2 + $0x2c] sm:$0xf]
    %v144 = vld [vmem:[#allocation2 + $0x30] sm:$0xf]
    %v145 = vld [vmem:[#allocation2 + $0x34] sm:$0xf]
    %v146 = vld [vmem:[#allocation2 + $0x38] sm:$0xf]
    %v147 = vld [vmem:[#allocation2 + $0x3c] sm:$0xf]
    %v148 = vld [vmem:[#allocation8] sm:$0xf]
    %v149 = vld [vmem:[#allocation8 + $0x4] sm:$0xf]
    %v150 = vld [vmem:[#allocation8 + $0x8] sm:$0xf]
    %v151 = vld [vmem:[#allocation8 + $0xc] sm:$0xf]
    %v152 = vld [vmem:[#allocation8 + $0x10] sm:$0xf]
    %v153 = vld [vmem:[#allocation8 + $0x14] sm:$0xf]
    %v154 = vld [vmem:[#allocation8 + $0x18] sm:$0xf]
    %v155 = vld [vmem:[#allocation8 + $0x1c] sm:$0xf]
    %v156 = vld [vmem:[#allocation8 + $0x20] sm:$0xf]
    %v157 = vld [vmem:[#allocation8 + $0x24] sm:$0xf]
    %v158 = vld [vmem:[#allocation8 + $0x28] sm:$0xf]
    %v159 = vld [vmem:[#allocation8 + $0x2c] sm:$0xf]
    %v160 = vld [vmem:[#allocation8 + $0x30] sm:$0xf]
    %v161 = vld [vmem:[#allocation8 + $0x34] sm:$0xf]
    %v162 = vld [vmem:[#allocation8 + $0x38] sm:$0xf]
    %v163 = vld [vmem:[#allocation8 + $0x3c] sm:$0xf]
    %v180 = vunpack.c.l.b16 %v132
    %v181 = vunpack.c.l.b16 %v133
    %v182 = vunpack.c.l.b16 %v134
    %v183 = vunpack.c.l.b16 %v135
    %v184 = vunpack.c.l.b16 %v136
    %v185 = vunpack.c.l.b16 %v137
    %v186 = vunpack.c.l.b16 %v138
    %v187 = vunpack.c.l.b16 %v139
    %v188 = vunpack.c.l.b16 %v140
    %v189 = vunpack.c.l.b16 %v141
    %v190 = vunpack.c.l.b16 %v142
    %v191 = vunpack.c.l.b16 %v143
    %v192 = vunpack.c.l.b16 %v144
    %v193 = vunpack.c.l.b16 %v145
    %v194 = vunpack.c.l.b16 %v146
    %v195 = vunpack.c.l.b16 %v147
    %v196 = vpack.c.b16 %v181, %v180
    %v197 = vpack.c.b16 %v183, %v182
    %v198 = vpack.c.b16 %v185, %v184
    %v199 = vpack.c.b16 %v187, %v186
    %v200 = vpack.c.b16 %v189, %v188
    %v201 = vpack.c.b16 %v191, %v190
    %v202 = vpack.c.b16 %v193, %v192
    %v203 = vpack.c.b16 %v195, %v194
    %v228 = vunpack.c.l.b16 %v148
    %v229 = vunpack.c.l.b16 %v149
    %v230 = vunpack.c.l.b16 %v150
    %v231 = vunpack.c.l.b16 %v151
    %v232 = vunpack.c.l.b16 %v152
    %v233 = vunpack.c.l.b16 %v153
    %v234 = vunpack.c.l.b16 %v154
    %v235 = vunpack.c.l.b16 %v155
    %v236 = vunpack.c.l.b16 %v156
    %v237 = vunpack.c.l.b16 %v157
    %v238 = vunpack.c.l.b16 %v158
    %v239 = vunpack.c.l.b16 %v159
    %v240 = vunpack.c.l.b16 %v160
    %v241 = vunpack.c.l.b16 %v161
    %v242 = vunpack.c.l.b16 %v162
    %v243 = vunpack.c.l.b16 %v163
    %v244 = vpack.c.b16 %v229, %v228
    %v245 = vpack.c.b16 %v231, %v230
    %v246 = vpack.c.b16 %v233, %v232
    %v247 = vpack.c.b16 %v235, %v234
    %v248 = vpack.c.b16 %v237, %v236
    %v249 = vpack.c.b16 %v239, %v238
    %v250 = vpack.c.b16 %v241, %v240
    %v251 = vpack.c.b16 %v243, %v242
    %260 = vmatprep.subr.bf16.mxu0 0
    %261 = vmatpush1.bf16.msra.mxu0 %v251
    %262 = vmatprep.subr.bf16.mxu0 0
    %263 = vmatpush1.bf16.msra.mxu0 %v250
    %264 = vmatprep.subr.bf16.mxu0 0
    %265 = vmatpush1.bf16.msra.mxu0 %v249
    %266 = vmatprep.subr.bf16.mxu0 0
    %267 = vmatpush1.bf16.msra.mxu0 %v248
    %268 = vmatprep.subr.bf16.mxu0 0
    %269 = vmatpush1.bf16.msra.mxu0 %v247
    %270 = vmatprep.subr.bf16.mxu0 0
    %271 = vmatpush1.bf16.msra.mxu0 %v246
    %272 = vmatprep.subr.bf16.mxu0 0
    %273 = vmatpush1.bf16.msra.mxu0 %v245
    %274 = vmatprep.subr.bf16.mxu0 0
    %275 = vmatpush1.bf16.msra.mxu0 %v244
    %276 = vmatprep.subr.bf16.mxu0 0
    %277 = vmatpush2.bf16.msra.mxu0 0
    %278 = vmatprep.subr.bf16.mxu0 0
    %279 = vmatpush2.bf16.msra.mxu0 0
    %280 = vmatprep.subr.bf16.mxu0 0
    %281 = vmatpush2.bf16.msra.mxu0 0
    %282 = vmatprep.subr.bf16.mxu0 0
    %283 = vmatpush2.bf16.msra.mxu0 0
    %284 = vmatprep.subr.bf16.mxu0 0
    %285 = vmatpush2.bf16.msra.mxu0 0
    %286 = vmatprep.subr.bf16.mxu0 0
    %287 = vmatpush2.bf16.msra.mxu0 0
    %288 = vmatprep.subr.bf16.mxu0 0
    %289 = vmatpush2.bf16.msra.mxu0 0
    %290 = vmatprep.subr.bf16.mxu0 0
    %291 = vmatpush2.bf16.msra.mxu0 0
    %292 = vmatprep.mubr.bf16.mxu0 0
    %293 = vmatmul.mubr.bf16.gmra.mxu0 %v196
    %v294 = vpop.f32.mrf.mxu0
    %v295 = vadd.f32 0.0, %v294
    %v296 = vpop.f32.mrf.mxu0
    %v297 = vpop.f32.mrf.mxu0
    %v298 = vadd.f32 0.0, %v297
    %v299 = vpop.f32.mrf.mxu0
    %300 = vmatprep.mubr.bf16.mxu0 0
    %301 = vmatmul.mubr.bf16.gmra.mxu0 %v197
    %v302 = vpop.f32.mrf.mxu0
    %v303 = vadd.f32 0.0, %v302
    %v304 = vpop.f32.mrf.mxu0
    %v305 = vpop.f32.mrf.mxu0
    %v306 = vadd.f32 0.0, %v305
    %v307 = vpop.f32.mrf.mxu0
    %308 = vmatprep.mubr.bf16.mxu0 0
    %309 = vmatmul.mubr.bf16.gmra.mxu0 %v198
    %v310 = vpop.f32.mrf.mxu0
    %v311 = vadd.f32 0.0, %v310
    %v312 = vpop.f32.mrf.mxu0
    %v313 = vpop.f32.mrf.mxu0
    %v314 = vadd.f32 0.0, %v313
    %v315 = vpop.f32.mrf.mxu0
    %316 = vmatprep.mubr.bf16.mxu0 0
    %317 = vmatmul.mubr.bf16.gmra.mxu0 %v199
    %v318 = vpop.f32.mrf.mxu0
    %v319 = vadd.f32 0.0, %v318
    %v320 = vpop.f32.mrf.mxu0
    %v321 = vpop.f32.mrf.mxu0
    %v322 = vadd.f32 0.0, %v321
    %v323 = vpop.f32.mrf.mxu0
    %324 = vmatprep.mubr.bf16.mxu0 0
    %325 = vmatmul.mubr.bf16.gmra.mxu0 %v200
    %v326 = vpop.f32.mrf.mxu0
    %v327 = vadd.f32 0.0, %v326
    %v328 = vpop.f32.mrf.mxu0
    %v329 = vpop.f32.mrf.mxu0
    %v330 = vadd.f32 0.0, %v329
    %v331 = vpop.f32.mrf.mxu0
    %332 = vmatprep.mubr.bf16.mxu0 0
    %333 = vmatmul.mubr.bf16.gmra.mxu0 %v201
    %v334 = vpop.f32.mrf.mxu0
    %v335 = vadd.f32 0.0, %v334
    %v336 = vpop.f32.mrf.mxu0
    %v337 = vpop.f32.mrf.mxu0
    %v338 = vadd.f32 0.0, %v337
    %v339 = vpop.f32.mrf.mxu0
    %340 = vmatprep.mubr.bf16.mxu0 0
    %341 = vmatmul.mubr.bf16.gmra.mxu0 %v202
    %v342 = vpop.f32.mrf.mxu0
    %v343 = vadd.f32 0.0, %v342
    %v344 = vpop.f32.mrf.mxu0
    %v345 = vpop.f32.mrf.mxu0
    %v346 = vadd.f32 0.0, %v345
    %v347 = vpop.f32.mrf.mxu0
    %348 = vmatprep.mubr.bf16.mxu0 0
    %349 = vmatmul.mubr.bf16.gmra.mxu0 %v203
    %v350 = vpop.f32.mrf.mxu0
    %v351 = vadd.f32 0.0, %v350
    %v352 = vpop.f32.mrf.mxu0
    %v353 = vpop.f32.mrf.mxu0
    %v354 = vadd.f32 0.0, %v353
    %v355 = vpop.f32.mrf.mxu0
    %356 = vdwg.mxu0
    %v357 = vpack.c.bf16 %v298, %v295
    %v358 = vpack.c.bf16 %v306, %v303
    %v359 = vpack.c.bf16 %v314, %v311
    %v360 = vpack.c.bf16 %v322, %v319
    %v361 = vpack.c.bf16 %v330, %v327
    %v362 = vpack.c.bf16 %v338, %v335
    %v363 = vpack.c.bf16 %v346, %v343
    %v364 = vpack.c.bf16 %v354, %v351
    %v366 = vlaneseq
    %v367 = vshrl.u32 %v366, 7
    %v368 = vsub.s32 0, %v367
    %v369 = vrot.slane %v127, %v368
    %v387 = vunpack.c.l.b16 %v111
    %v388 = vunpack.c.l.b16 %v112
    %v389 = vunpack.c.l.b16 %v113
    %v390 = vunpack.c.l.b16 %v114
    %v391 = vunpack.c.l.b16 %v115
    %v392 = vunpack.c.l.b16 %v116
    %v393 = vunpack.c.l.b16 %v117
    %v394 = vunpack.c.l.b16 %v118
    %v395 = vunpack.c.l.b16 %v119
    %v396 = vunpack.c.l.b16 %v120
    %v397 = vunpack.c.l.b16 %v121
    %v398 = vunpack.c.l.b16 %v122
    %v399 = vunpack.c.l.b16 %v123
    %v400 = vunpack.c.l.b16 %v124
    %v401 = vunpack.c.l.b16 %v125
    %v402 = vunpack.c.l.b16 %v126
    %v403 = vpack.c.b16 %v388, %v387
    %v404 = vpack.c.b16 %v390, %v389
    %v405 = vpack.c.b16 %v392, %v391
    %v406 = vpack.c.b16 %v394, %v393
    %v407 = vpack.c.b16 %v396, %v395
    %v408 = vpack.c.b16 %v398, %v397
    %v409 = vpack.c.b16 %v400, %v399
    %v410 = vpack.c.b16 %v402, %v401
    %419 = vmatprep.subr.bf16.mxu0 0
    %420 = vmatpush1.bf16.msra.mxu0 %v364
    %421 = vmatprep.subr.bf16.mxu0 0
    %422 = vmatpush1.bf16.msra.mxu0 %v363
    %423 = vmatprep.subr.bf16.mxu0 0
    %424 = vmatpush1.bf16.msra.mxu0 %v362
    %425 = vmatprep.subr.bf16.mxu0 0
    %426 = vmatpush1.bf16.msra.mxu0 %v361
    %427 = vmatprep.subr.bf16.mxu0 0
    %428 = vmatpush1.bf16.msra.mxu0 %v360
    %429 = vmatprep.subr.bf16.mxu0 0
    %430 = vmatpush1.bf16.msra.mxu0 %v359
    %431 = vmatprep.subr.bf16.mxu0 0
    %432 = vmatpush1.bf16.msra.mxu0 %v358
    %433 = vmatprep.subr.bf16.mxu0 0
    %434 = vmatpush1.bf16.msra.mxu0 %v357
    %435 = vmatprep.subr.bf16.mxu0 0
    %436 = vmatpush2.bf16.msra.mxu0 0
    %437 = vmatprep.subr.bf16.mxu0 0
    %438 = vmatpush2.bf16.msra.mxu0 0
    %439 = vmatprep.subr.bf16.mxu0 0
    %440 = vmatpush2.bf16.msra.mxu0 0
    %441 = vmatprep.subr.bf16.mxu0 0
    %442 = vmatpush2.bf16.msra.mxu0 0
    %443 = vmatprep.subr.bf16.mxu0 0
    %444 = vmatpush2.bf16.msra.mxu0 0
    %445 = vmatprep.subr.bf16.mxu0 0
    %446 = vmatpush2.bf16.msra.mxu0 0
    %447 = vmatprep.subr.bf16.mxu0 0
    %448 = vmatpush2.bf16.msra.mxu0 0
    %449 = vmatprep.subr.bf16.mxu0 0
    %450 = vmatpush2.bf16.msra.mxu0 0
    %451 = vmatprep.mubr.bf16.mxu0 0
    %452 = vmatmul.mubr.bf16.gmra.mxu0 %v403
    %v453 = vpop.f32.mrf.mxu0
    %v454 = vadd.f32 %v369, %v453
    %v455 = vpop.f32.mrf.mxu0
    %v456 = vpop.f32.mrf.mxu0
    %v457 = vadd.f32 %v369, %v456
    %v458 = vpop.f32.mrf.mxu0
    %459 = vmatprep.mubr.bf16.mxu0 0
    %460 = vmatmul.mubr.bf16.gmra.mxu0 %v404
    %v461 = vpop.f32.mrf.mxu0
    %v462 = vadd.f32 %v369, %v461
    %v463 = vpop.f32.mrf.mxu0
    %v464 = vpop.f32.mrf.mxu0
    %v465 = vadd.f32 %v369, %v464
    %v466 = vpop.f32.mrf.mxu0
    %467 = vmatprep.mubr.bf16.mxu0 0
    %468 = vmatmul.mubr.bf16.gmra.mxu0 %v405
    %v469 = vpop.f32.mrf.mxu0
    %v470 = vadd.f32 %v369, %v469
    %v471 = vpop.f32.mrf.mxu0
    %v472 = vpop.f32.mrf.mxu0
    %v473 = vadd.f32 %v369, %v472
    %v474 = vpop.f32.mrf.mxu0
    %475 = vmatprep.mubr.bf16.mxu0 0
    %476 = vmatmul.mubr.bf16.gmra.mxu0 %v406
    %v477 = vpop.f32.mrf.mxu0
    %v478 = vadd.f32 %v369, %v477
    %v479 = vpop.f32.mrf.mxu0
    %v480 = vpop.f32.mrf.mxu0
    %v481 = vadd.f32 %v369, %v480
    %v482 = vpop.f32.mrf.mxu0
    %483 = vmatprep.mubr.bf16.mxu0 0
    %484 = vmatmul.mubr.bf16.gmra.mxu0 %v407
    %v485 = vpop.f32.mrf.mxu0
    %v486 = vadd.f32 %v369, %v485
    %v487 = vpop.f32.mrf.mxu0
    %v488 = vpop.f32.mrf.mxu0
    %v489 = vadd.f32 %v369, %v488
    %v490 = vpop.f32.mrf.mxu0
    %491 = vmatprep.mubr.bf16.mxu0 0
    %492 = vmatmul.mubr.bf16.gmra.mxu0 %v408
    %v493 = vpop.f32.mrf.mxu0
    %v494 = vadd.f32 %v369, %v493
    %v495 = vpop.f32.mrf.mxu0
    %v496 = vpop.f32.mrf.mxu0
    %v497 = vadd.f32 %v369, %v496
    %v498 = vpop.f32.mrf.mxu0
    %499 = vmatprep.mubr.bf16.mxu0 0
    %500 = vmatmul.mubr.bf16.gmra.mxu0 %v409
    %v501 = vpop.f32.mrf.mxu0
    %v502 = vadd.f32 %v369, %v501
    %v503 = vpop.f32.mrf.mxu0
    %v504 = vpop.f32.mrf.mxu0
    %v505 = vadd.f32 %v369, %v504
    %v506 = vpop.f32.mrf.mxu0
    %507 = vmatprep.mubr.bf16.mxu0 0
    %508 = vmatmul.mubr.bf16.gmra.mxu0 %v410
    %v509 = vpop.f32.mrf.mxu0
    %v510 = vadd.f32 %v369, %v509
    %v511 = vpop.f32.mrf.mxu0
    %v512 = vpop.f32.mrf.mxu0
    %v513 = vadd.f32 %v369, %v512
    %v514 = vpop.f32.mrf.mxu0
    %515 = vdwg.mxu0
    %v516 = vmax.f32 %v454, 0.0
    %v517 = vmax.f32 %v457, 0.0
    %v518 = vmax.f32 %v462, 0.0
    %v519 = vmax.f32 %v465, 0.0
    %v520 = vmax.f32 %v470, 0.0
    %v521 = vmax.f32 %v473, 0.0
    %v522 = vmax.f32 %v478, 0.0
    %v523 = vmax.f32 %v481, 0.0
    %v524 = vmax.f32 %v486, 0.0
    %v525 = vmax.f32 %v489, 0.0
    %v526 = vmax.f32 %v494, 0.0
    %v527 = vmax.f32 %v497, 0.0
    %v528 = vmax.f32 %v502, 0.0
    %v529 = vmax.f32 %v505, 0.0
    %v530 = vmax.f32 %v510, 0.0
    %v531 = vmax.f32 %v513, 0.0
    %v532 = vpack.c.bf16 %v517, %v516
    %v533 = vpack.c.bf16 %v519, %v518
    %v534 = vpack.c.bf16 %v521, %v520
    %v535 = vpack.c.bf16 %v523, %v522
    %v536 = vpack.c.bf16 %v525, %v524
    %v537 = vpack.c.bf16 %v527, %v526
    %v538 = vpack.c.bf16 %v529, %v528
    %v539 = vpack.c.bf16 %v531, %v530
    %v540 = vld [vmem:[#allocation10] sm:$0xf]
    %v541 = vld [vmem:[#allocation10 + $0xc] sm:$0xf]
    %v542 = vld [vmem:[#allocation10 + $0x18] sm:$0xf]
    %v543 = vld [vmem:[#allocation10 + $0x24] sm:$0xf]
    %v544 = vld [vmem:[#allocation10 + $0x30] sm:$0xf]
    %v545 = vld [vmem:[#allocation10 + $0x3c] sm:$0xf]
    %v546 = vld [vmem:[#allocation10 + $0x48] sm:$0xf]
    %v547 = vld [vmem:[#allocation10 + $0x54] sm:$0xf]
    %v548 = vld [vmem:[#allocation10 + $0x60] sm:$0xf]
    %v549 = vld [vmem:[#allocation10 + $0x6c] sm:$0xf]
    %v550 = vld [vmem:[#allocation10 + $0x78] sm:$0xf]
    %v551 = vld [vmem:[#allocation10 + $0x84] sm:$0xf]
    %v552 = vld [vmem:[#allocation10 + $0x90] sm:$0xf]
    %v553 = vld [vmem:[#allocation10 + $0x9c] sm:$0xf]
    %v554 = vld [vmem:[#allocation10 + $0xa8] sm:$0xf]
    %v555 = vld [vmem:[#allocation10 + $0xb4] sm:$0xf]
    %v572 = vunpack.c.l.b16 %v540
    %v573 = vunpack.c.l.b16 %v541
    %v574 = vunpack.c.l.b16 %v542
    %v575 = vunpack.c.l.b16 %v543
    %v576 = vunpack.c.l.b16 %v544
    %v577 = vunpack.c.l.b16 %v545
    %v578 = vunpack.c.l.b16 %v546
    %v579 = vunpack.c.l.b16 %v547
    %v580 = vunpack.c.l.b16 %v548
    %v581 = vunpack.c.l.b16 %v549
    %v582 = vunpack.c.l.b16 %v550
    %v583 = vunpack.c.l.b16 %v551
    %v584 = vunpack.c.l.b16 %v552
    %v585 = vunpack.c.l.b16 %v553
    %v586 = vunpack.c.l.b16 %v554
    %v587 = vunpack.c.l.b16 %v555
    %v588 = vpack.c.b16 %v573, %v572
    %v589 = vpack.c.b16 %v575, %v574
    %v590 = vpack.c.b16 %v577, %v576
    %v591 = vpack.c.b16 %v579, %v578
    %v592 = vpack.c.b16 %v581, %v580
    %v593 = vpack.c.b16 %v583, %v582
    %v594 = vpack.c.b16 %v585, %v584
    %v595 = vpack.c.b16 %v587, %v586
    %604 = vmatprep.subr.bf16.mxu0 0
    %605 = vmatpush1.bf16.msra.mxu0 %v595
    %606 = vmatprep.subr.bf16.mxu0 0
    %607 = vmatpush1.bf16.msra.mxu0 %v594
    %608 = vmatprep.subr.bf16.mxu0 0
    %609 = vmatpush1.bf16.msra.mxu0 %v593
    %610 = vmatprep.subr.bf16.mxu0 0
    %611 = vmatpush1.bf16.msra.mxu0 %v592
    %612 = vmatprep.subr.bf16.mxu0 0
    %613 = vmatpush1.bf16.msra.mxu0 %v591
    %614 = vmatprep.subr.bf16.mxu0 0
    %615 = vmatpush1.bf16.msra.mxu0 %v590
    %616 = vmatprep.subr.bf16.mxu0 0
    %617 = vmatpush1.bf16.msra.mxu0 %v589
    %618 = vmatprep.subr.bf16.mxu0 0
    %619 = vmatpush1.bf16.msra.mxu0 %v588
    %620 = vmatprep.subr.bf16.mxu0 0
    %621 = vmatpush2.bf16.msra.mxu0 0
    %622 = vmatprep.subr.bf16.mxu0 0
    %623 = vmatpush2.bf16.msra.mxu0 0
    %624 = vmatprep.subr.bf16.mxu0 0
    %625 = vmatpush2.bf16.msra.mxu0 0
    %626 = vmatprep.subr.bf16.mxu0 0
    %627 = vmatpush2.bf16.msra.mxu0 0
    %628 = vmatprep.subr.bf16.mxu0 0
    %629 = vmatpush2.bf16.msra.mxu0 0
    %630 = vmatprep.subr.bf16.mxu0 0
    %631 = vmatpush2.bf16.msra.mxu0 0
    %632 = vmatprep.subr.bf16.mxu0 0
    %633 = vmatpush2.bf16.msra.mxu0 0
    %634 = vmatprep.subr.bf16.mxu0 0
    %635 = vmatpush2.bf16.msra.mxu0 0
    %636 = vmatprep.mubr.bf16.mxu0 0
    %637 = vmatmul.mubr.bf16.gmra.mxu0 %v532
    %v638 = vpop.f32.mrf.mxu0
    %v639 = vadd.f32 0.0, %v638
    %v640 = vpop.f32.mrf.mxu0
    %v641 = vpop.f32.mrf.mxu0
    %v642 = vadd.f32 0.0, %v641
    %v643 = vpop.f32.mrf.mxu0
    %644 = vmatprep.mubr.bf16.mxu0 0
    %645 = vmatmul.mubr.bf16.gmra.mxu0 %v533
    %v646 = vpop.f32.mrf.mxu0
    %v647 = vadd.f32 0.0, %v646
    %v648 = vpop.f32.mrf.mxu0
    %v649 = vpop.f32.mrf.mxu0
    %v650 = vadd.f32 0.0, %v649
    %v651 = vpop.f32.mrf.mxu0
    %652 = vmatprep.mubr.bf16.mxu0 0
    %653 = vmatmul.mubr.bf16.gmra.mxu0 %v534
    %v654 = vpop.f32.mrf.mxu0
    %v655 = vadd.f32 0.0, %v654
    %v656 = vpop.f32.mrf.mxu0
    %v657 = vpop.f32.mrf.mxu0
    %v658 = vadd.f32 0.0, %v657
    %v659 = vpop.f32.mrf.mxu0
    %660 = vmatprep.mubr.bf16.mxu0 0
    %661 = vmatmul.mubr.bf16.gmra.mxu0 %v535
    %v662 = vpop.f32.mrf.mxu0
    %v663 = vadd.f32 0.0, %v662
    %v664 = vpop.f32.mrf.mxu0
    %v665 = vpop.f32.mrf.mxu0
    %v666 = vadd.f32 0.0, %v665
    %v667 = vpop.f32.mrf.mxu0
    %668 = vmatprep.mubr.bf16.mxu0 0
    %669 = vmatmul.mubr.bf16.gmra.mxu0 %v536
    %v670 = vpop.f32.mrf.mxu0
    %v671 = vadd.f32 0.0, %v670
    %v672 = vpop.f32.mrf.mxu0
    %v673 = vpop.f32.mrf.mxu0
    %v674 = vadd.f32 0.0, %v673
    %v675 = vpop.f32.mrf.mxu0
    %676 = vmatprep.mubr.bf16.mxu0 0
    %677 = vmatmul.mubr.bf16.gmra.mxu0 %v537
    %v678 = vpop.f32.mrf.mxu0
    %v679 = vadd.f32 0.0, %v678
    %v680 = vpop.f32.mrf.mxu0
    %v681 = vpop.f32.mrf.mxu0
    %v682 = vadd.f32 0.0, %v681
    %v683 = vpop.f32.mrf.mxu0
    %684 = vmatprep.mubr.bf16.mxu0 0
    %685 = vmatmul.mubr.bf16.gmra.mxu0 %v538
    %v686 = vpop.f32.mrf.mxu0
    %v687 = vadd.f32 0.0, %v686
    %v688 = vpop.f32.mrf.mxu0
    %v689 = vpop.f32.mrf.mxu0
    %v690 = vadd.f32 0.0, %v689
    %v691 = vpop.f32.mrf.mxu0
    %692 = vmatprep.mubr.bf16.mxu0 0
    %693 = vmatmul.mubr.bf16.gmra.mxu0 %v539
    %v694 = vpop.f32.mrf.mxu0
    %v695 = vadd.f32 0.0, %v694
    %v696 = vpop.f32.mrf.mxu0
    %v697 = vpop.f32.mrf.mxu0
    %v698 = vadd.f32 0.0, %v697
    %v699 = vpop.f32.mrf.mxu0
    %700 = vdwg.mxu0
    %v701 = vpack.c.bf16 %v642, %v639
    %v702 = vpack.c.bf16 %v650, %v647
    %v703 = vpack.c.bf16 %v658, %v655
    %v704 = vpack.c.bf16 %v666, %v663
    %v705 = vpack.c.bf16 %v674, %v671
    %v706 = vpack.c.bf16 %v682, %v679
    %v707 = vpack.c.bf16 %v690, %v687
    %v708 = vpack.c.bf16 %v698, %v695
    %v710 = vlaneseq
    %v711 = vshrl.u32 %v710, 7
    %v712 = vsub.s32 0, %v711
    %v713 = vrot.slane %v128, %v712
    %715 = vmatprep.subr.bf16.mxu0 0
    %716 = vmatpush1.bf16.msra.mxu0 %v708
    %717 = vmatprep.subr.bf16.mxu0 0
    %718 = vmatpush1.bf16.msra.mxu0 %v707
    %719 = vmatprep.subr.bf16.mxu0 0
    %720 = vmatpush1.bf16.msra.mxu0 %v706
    %721 = vmatprep.subr.bf16.mxu0 0
    %722 = vmatpush1.bf16.msra.mxu0 %v705
    %723 = vmatprep.subr.bf16.mxu0 0
    %724 = vmatpush1.bf16.msra.mxu0 %v704
    %725 = vmatprep.subr.bf16.mxu0 0
    %726 = vmatpush1.bf16.msra.mxu0 %v703
    %727 = vmatprep.subr.bf16.mxu0 0
    %728 = vmatpush1.bf16.msra.mxu0 %v702
    %729 = vmatprep.subr.bf16.mxu0 0
    %730 = vmatpush1.bf16.msra.mxu0 %v701
    %731 = vmatprep.subr.bf16.mxu0 0
    %732 = vmatpush2.bf16.msra.mxu0 0
    %733 = vmatprep.subr.bf16.mxu0 0
    %734 = vmatpush2.bf16.msra.mxu0 0
    %735 = vmatprep.subr.bf16.mxu0 0
    %736 = vmatpush2.bf16.msra.mxu0 0
    %737 = vmatprep.subr.bf16.mxu0 0
    %738 = vmatpush2.bf16.msra.mxu0 0
    %739 = vmatprep.subr.bf16.mxu0 0
    %740 = vmatpush2.bf16.msra.mxu0 0
    %741 = vmatprep.subr.bf16.mxu0 0
    %742 = vmatpush2.bf16.msra.mxu0 0
    %743 = vmatprep.subr.bf16.mxu0 0
    %744 = vmatpush2.bf16.msra.mxu0 0
    %745 = vmatprep.subr.bf16.mxu0 0
    %746 = vmatpush2.bf16.msra.mxu0 0
    %747 = vmatprep.mubr.bf16.mxu0 0
    %748 = vmatmul.mubr.bf16.gmra.mxu0 %v403
    %v749 = vpop.f32.mrf.mxu0
    %v750 = vadd.f32 %v713, %v749
    %v751 = vpop.f32.mrf.mxu0
    %v752 = vpop.f32.mrf.mxu0
    %v753 = vadd.f32 %v713, %v752
    %v754 = vpop.f32.mrf.mxu0
    %755 = vmatprep.mubr.bf16.mxu0 0
    %756 = vmatmul.mubr.bf16.gmra.mxu0 %v404
    %v757 = vpop.f32.mrf.mxu0
    %v758 = vadd.f32 %v713, %v757
    %v759 = vpop.f32.mrf.mxu0
    %v760 = vpop.f32.mrf.mxu0
    %v761 = vadd.f32 %v713, %v760
    %v762 = vpop.f32.mrf.mxu0
    %763 = vmatprep.mubr.bf16.mxu0 0
    %764 = vmatmul.mubr.bf16.gmra.mxu0 %v405
    %v765 = vpop.f32.mrf.mxu0
    %v766 = vadd.f32 %v713, %v765
    %v767 = vpop.f32.mrf.mxu0
    %v768 = vpop.f32.mrf.mxu0
    %v769 = vadd.f32 %v713, %v768
    %v770 = vpop.f32.mrf.mxu0
    %771 = vmatprep.mubr.bf16.mxu0 0
    %772 = vmatmul.mubr.bf16.gmra.mxu0 %v406
    %v773 = vpop.f32.mrf.mxu0
    %v774 = vadd.f32 %v713, %v773
    %v775 = vpop.f32.mrf.mxu0
    %v776 = vpop.f32.mrf.mxu0
    %v777 = vadd.f32 %v713, %v776
    %v778 = vpop.f32.mrf.mxu0
    %779 = vmatprep.mubr.bf16.mxu0 0
    %780 = vmatmul.mubr.bf16.gmra.mxu0 %v407
    %v781 = vpop.f32.mrf.mxu0
    %v782 = vadd.f32 %v713, %v781
    %v783 = vpop.f32.mrf.mxu0
    %v784 = vpop.f32.mrf.mxu0
    %v785 = vadd.f32 %v713, %v784
    %v786 = vpop.f32.mrf.mxu0
    %787 = vmatprep.mubr.bf16.mxu0 0
    %788 = vmatmul.mubr.bf16.gmra.mxu0 %v408
    %v789 = vpop.f32.mrf.mxu0
    %v790 = vadd.f32 %v713, %v789
    %v791 = vpop.f32.mrf.mxu0
    %v792 = vpop.f32.mrf.mxu0
    %v793 = vadd.f32 %v713, %v792
    %v794 = vpop.f32.mrf.mxu0
    %795 = vmatprep.mubr.bf16.mxu0 0
    %796 = vmatmul.mubr.bf16.gmra.mxu0 %v409
    %v797 = vpop.f32.mrf.mxu0
    %v798 = vadd.f32 %v713, %v797
    %v799 = vpop.f32.mrf.mxu0
    %v800 = vpop.f32.mrf.mxu0
    %v801 = vadd.f32 %v713, %v800
    %v802 = vpop.f32.mrf.mxu0
    %803 = vmatprep.mubr.bf16.mxu0 0
    %804 = vmatmul.mubr.bf16.gmra.mxu0 %v410
    %v805 = vpop.f32.mrf.mxu0
    %v806 = vadd.f32 %v713, %v805
    %v807 = vpop.f32.mrf.mxu0
    %v808 = vpop.f32.mrf.mxu0
    %v809 = vadd.f32 %v713, %v808
    %v810 = vpop.f32.mrf.mxu0
    %811 = vdwg.mxu0
    %v812 = vmax.f32 %v750, 0.0
    %v813 = vmax.f32 %v753, 0.0
    %v814 = vmax.f32 %v758, 0.0
    %v815 = vmax.f32 %v761, 0.0
    %v816 = vmax.f32 %v766, 0.0
    %v817 = vmax.f32 %v769, 0.0
    %v818 = vmax.f32 %v774, 0.0
    %v819 = vmax.f32 %v777, 0.0
    %v820 = vmax.f32 %v782, 0.0
    %v821 = vmax.f32 %v785, 0.0
    %v822 = vmax.f32 %v790, 0.0
    %v823 = vmax.f32 %v793, 0.0
    %v824 = vmax.f32 %v798, 0.0
    %v825 = vmax.f32 %v801, 0.0
    %v826 = vmax.f32 %v806, 0.0
    %v827 = vmax.f32 %v809, 0.0
    %v828 = vpack.c.bf16 %v813, %v812
    %v829 = vpack.c.bf16 %v815, %v814
    %v830 = vpack.c.bf16 %v817, %v816
    %v831 = vpack.c.bf16 %v819, %v818
    %v832 = vpack.c.bf16 %v821, %v820
    %v833 = vpack.c.bf16 %v823, %v822
    %v834 = vpack.c.bf16 %v825, %v824
    %v835 = vpack.c.bf16 %v827, %v826
    %v836 = vld [vmem:[#allocation10 + $0x4] sm:$0xf]
    %v837 = vld [vmem:[#allocation10 + $0x10] sm:$0xf]
    %v838 = vld [vmem:[#allocation10 + $0x1c] sm:$0xf]
    %v839 = vld [vmem:[#allocation10 + $0x28] sm:$0xf]
    %v840 = vld [vmem:[#allocation10 + $0x34] sm:$0xf]
    %v841 = vld [vmem:[#allocation10 + $0x40] sm:$0xf]
    %v842 = vld [vmem:[#allocation10 + $0x4c] sm:$0xf]
    %v843 = vld [vmem:[#allocation10 + $0x58] sm:$0xf]
    %v844 = vld [vmem:[#allocation10 + $0x64] sm:$0xf]
    %v845 = vld [vmem:[#allocation10 + $0x70] sm:$0xf]
    %v846 = vld [vmem:[#allocation10 + $0x7c] sm:$0xf]
    %v847 = vld [vmem:[#allocation10 + $0x88] sm:$0xf]
    %v848 = vld [vmem:[#allocation10 + $0x94] sm:$0xf]
    %v849 = vld [vmem:[#allocation10 + $0xa0] sm:$0xf]
    %v850 = vld [vmem:[#allocation10 + $0xac] sm:$0xf]
    %v851 = vld [vmem:[#allocation10 + $0xb8] sm:$0xf]
    %v868 = vunpack.c.l.b16 %v836
    %v869 = vunpack.c.l.b16 %v837
    %v870 = vunpack.c.l.b16 %v838
    %v871 = vunpack.c.l.b16 %v839
    %v872 = vunpack.c.l.b16 %v840
    %v873 = vunpack.c.l.b16 %v841
    %v874 = vunpack.c.l.b16 %v842
    %v875 = vunpack.c.l.b16 %v843
    %v876 = vunpack.c.l.b16 %v844
    %v877 = vunpack.c.l.b16 %v845
    %v878 = vunpack.c.l.b16 %v846
    %v879 = vunpack.c.l.b16 %v847
    %v880 = vunpack.c.l.b16 %v848
    %v881 = vunpack.c.l.b16 %v849
    %v882 = vunpack.c.l.b16 %v850
    %v883 = vunpack.c.l.b16 %v851
    %v884 = vpack.c.b16 %v869, %v868
    %v885 = vpack.c.b16 %v871, %v870
    %v886 = vpack.c.b16 %v873, %v872
    %v887 = vpack.c.b16 %v875, %v874
    %v888 = vpack.c.b16 %v877, %v876
    %v889 = vpack.c.b16 %v879, %v878
    %v890 = vpack.c.b16 %v881, %v880
    %v891 = vpack.c.b16 %v883, %v882
    %900 = vmatprep.subr.bf16.mxu0 0
    %901 = vmatpush1.bf16.msra.mxu0 %v891
    %902 = vmatprep.subr.bf16.mxu0 0
    %903 = vmatpush1.bf16.msra.mxu0 %v890
    %904 = vmatprep.subr.bf16.mxu0 0
    %905 = vmatpush1.bf16.msra.mxu0 %v889
    %906 = vmatprep.subr.bf16.mxu0 0
    %907 = vmatpush1.bf16.msra.mxu0 %v888
    %908 = vmatprep.subr.bf16.mxu0 0
    %909 = vmatpush1.bf16.msra.mxu0 %v887
    %910 = vmatprep.subr.bf16.mxu0 0
    %911 = vmatpush1.bf16.msra.mxu0 %v886
    %912 = vmatprep.subr.bf16.mxu0 0
    %913 = vmatpush1.bf16.msra.mxu0 %v885
    %914 = vmatprep.subr.bf16.mxu0 0
    %915 = vmatpush1.bf16.msra.mxu0 %v884
    %916 = vmatprep.subr.bf16.mxu0 0
    %917 = vmatpush2.bf16.msra.mxu0 0
    %918 = vmatprep.subr.bf16.mxu0 0
    %919 = vmatpush2.bf16.msra.mxu0 0
    %920 = vmatprep.subr.bf16.mxu0 0
    %921 = vmatpush2.bf16.msra.mxu0 0
    %922 = vmatprep.subr.bf16.mxu0 0
    %923 = vmatpush2.bf16.msra.mxu0 0
    %924 = vmatprep.subr.bf16.mxu0 0
    %925 = vmatpush2.bf16.msra.mxu0 0
    %926 = vmatprep.subr.bf16.mxu0 0
    %927 = vmatpush2.bf16.msra.mxu0 0
    %928 = vmatprep.subr.bf16.mxu0 0
    %929 = vmatpush2.bf16.msra.mxu0 0
    %930 = vmatprep.subr.bf16.mxu0 0
    %931 = vmatpush2.bf16.msra.mxu0 0
    %932 = vmatprep.mubr.bf16.mxu0 0
    %933 = vmatmul.mubr.bf16.gmra.mxu0 %v828
    %v934 = vpop.f32.mrf.mxu0
    %v935 = vadd.f32 0.0, %v934
    %v936 = vpop.f32.mrf.mxu0
    %v937 = vpop.f32.mrf.mxu0
    %v938 = vadd.f32 0.0, %v937
    %v939 = vpop.f32.mrf.mxu0
    %940 = vmatprep.mubr.bf16.mxu0 0
    %941 = vmatmul.mubr.bf16.gmra.mxu0 %v829
    %v942 = vpop.f32.mrf.mxu0
    %v943 = vadd.f32 0.0, %v942
    %v944 = vpop.f32.mrf.mxu0
    %v945 = vpop.f32.mrf.mxu0
    %v946 = vadd.f32 0.0, %v945
    %v947 = vpop.f32.mrf.mxu0
    %948 = vmatprep.mubr.bf16.mxu0 0
    %949 = vmatmul.mubr.bf16.gmra.mxu0 %v830
    %v950 = vpop.f32.mrf.mxu0
    %v951 = vadd.f32 0.0, %v950
    %v952 = vpop.f32.mrf.mxu0
    %v953 = vpop.f32.mrf.mxu0
    %v954 = vadd.f32 0.0, %v953
    %v955 = vpop.f32.mrf.mxu0
    %956 = vmatprep.mubr.bf16.mxu0 0
    %957 = vmatmul.mubr.bf16.gmra.mxu0 %v831
    %v958 = vpop.f32.mrf.mxu0
    %v959 = vadd.f32 0.0, %v958
    %v960 = vpop.f32.mrf.mxu0
    %v961 = vpop.f32.mrf.mxu0
    %v962 = vadd.f32 0.0, %v961
    %v963 = vpop.f32.mrf.mxu0
    %964 = vmatprep.mubr.bf16.mxu0 0
    %965 = vmatmul.mubr.bf16.gmra.mxu0 %v832
    %v966 = vpop.f32.mrf.mxu0
    %v967 = vadd.f32 0.0, %v966
    %v968 = vpop.f32.mrf.mxu0
    %v969 = vpop.f32.mrf.mxu0
    %v970 = vadd.f32 0.0, %v969
    %v971 = vpop.f32.mrf.mxu0
    %972 = vmatprep.mubr.bf16.mxu0 0
    %973 = vmatmul.mubr.bf16.gmra.mxu0 %v833
    %v974 = vpop.f32.mrf.mxu0
    %v975 = vadd.f32 0.0, %v974
    %v976 = vpop.f32.mrf.mxu0
    %v977 = vpop.f32.mrf.mxu0
    %v978 = vadd.f32 0.0, %v977
    %v979 = vpop.f32.mrf.mxu0
    %980 = vmatprep.mubr.bf16.mxu0 0
    %981 = vmatmul.mubr.bf16.gmra.mxu0 %v834
    %v982 = vpop.f32.mrf.mxu0
    %v983 = vadd.f32 0.0, %v982
    %v984 = vpop.f32.mrf.mxu0
    %v985 = vpop.f32.mrf.mxu0
    %v986 = vadd.f32 0.0, %v985
    %v987 = vpop.f32.mrf.mxu0
    %988 = vmatprep.mubr.bf16.mxu0 0
    %989 = vmatmul.mubr.bf16.gmra.mxu0 %v835
    %v990 = vpop.f32.mrf.mxu0
    %v991 = vadd.f32 0.0, %v990
    %v992 = vpop.f32.mrf.mxu0
    %v993 = vpop.f32.mrf.mxu0
    %v994 = vadd.f32 0.0, %v993
    %v995 = vpop.f32.mrf.mxu0
    %996 = vdwg.mxu0
    %v997 = vpack.c.bf16 %v938, %v935
    %v998 = vpack.c.bf16 %v946, %v943
    %v999 = vpack.c.bf16 %v954, %v951
    %v1000 = vpack.c.bf16 %v962, %v959
    %v1001 = vpack.c.bf16 %v970, %v967
    %v1002 = vpack.c.bf16 %v978, %v975
    %v1003 = vpack.c.bf16 %v986, %v983
    %v1004 = vpack.c.bf16 %v994, %v991
    %v1006 = vlaneseq
    %v1007 = vshrl.u32 %v1006, 7
    %v1008 = vsub.s32 0, %v1007
    %v1009 = vrot.slane %v129, %v1008
    %1011 = vmatprep.subr.bf16.mxu0 0
    %1012 = vmatpush1.bf16.msra.mxu0 %v1004
    %1013 = vmatprep.subr.bf16.mxu0 0
    %1014 = vmatpush1.bf16.msra.mxu0 %v1003
    %1015 = vmatprep.subr.bf16.mxu0 0
    %1016 = vmatpush1.bf16.msra.mxu0 %v1002
    %1017 = vmatprep.subr.bf16.mxu0 0
    %1018 = vmatpush1.bf16.msra.mxu0 %v1001
    %1019 = vmatprep.subr.bf16.mxu0 0
    %1020 = vmatpush1.bf16.msra.mxu0 %v1000
    %1021 = vmatprep.subr.bf16.mxu0 0
    %1022 = vmatpush1.bf16.msra.mxu0 %v999
    %1023 = vmatprep.subr.bf16.mxu0 0
    %1024 = vmatpush1.bf16.msra.mxu0 %v998
    %1025 = vmatprep.subr.bf16.mxu0 0
    %1026 = vmatpush1.bf16.msra.mxu0 %v997
    %1027 = vmatprep.subr.bf16.mxu0 0
    %1028 = vmatpush2.bf16.msra.mxu0 0
    %1029 = vmatprep.subr.bf16.mxu0 0
    %1030 = vmatpush2.bf16.msra.mxu0 0
    %1031 = vmatprep.subr.bf16.mxu0 0
    %1032 = vmatpush2.bf16.msra.mxu0 0
    %1033 = vmatprep.subr.bf16.mxu0 0
    %1034 = vmatpush2.bf16.msra.mxu0 0
    %1035 = vmatprep.subr.bf16.mxu0 0
    %1036 = vmatpush2.bf16.msra.mxu0 0
    %1037 = vmatprep.subr.bf16.mxu0 0
    %1038 = vmatpush2.bf16.msra.mxu0 0
    %1039 = vmatprep.subr.bf16.mxu0 0
    %1040 = vmatpush2.bf16.msra.mxu0 0
    %1041 = vmatprep.subr.bf16.mxu0 0
    %1042 = vmatpush2.bf16.msra.mxu0 0
    %1043 = vmatprep.mubr.bf16.mxu0 0
    %1044 = vmatmul.mubr.bf16.gmra.mxu0 %v403
    %v1045 = vpop.f32.mrf.mxu0
    %v1046 = vadd.f32 %v1009, %v1045
    %v1047 = vpop.f32.mrf.mxu0
    %v1048 = vpop.f32.mrf.mxu0
    %v1049 = vadd.f32 %v1009, %v1048
    %v1050 = vpop.f32.mrf.mxu0
    %1051 = vmatprep.mubr.bf16.mxu0 0
    %1052 = vmatmul.mubr.bf16.gmra.mxu0 %v404
    %v1053 = vpop.f32.mrf.mxu0
    %v1054 = vadd.f32 %v1009, %v1053
    %v1055 = vpop.f32.mrf.mxu0
    %v1056 = vpop.f32.mrf.mxu0
    %v1057 = vadd.f32 %v1009, %v1056
    %v1058 = vpop.f32.mrf.mxu0
    %1059 = vmatprep.mubr.bf16.mxu0 0
    %1060 = vmatmul.mubr.bf16.gmra.mxu0 %v405
    %v1061 = vpop.f32.mrf.mxu0
    %v1062 = vadd.f32 %v1009, %v1061
    %v1063 = vpop.f32.mrf.mxu0
    %v1064 = vpop.f32.mrf.mxu0
    %v1065 = vadd.f32 %v1009, %v1064
    %v1066 = vpop.f32.mrf.mxu0
    %1067 = vmatprep.mubr.bf16.mxu0 0
    %1068 = vmatmul.mubr.bf16.gmra.mxu0 %v406
    %v1069 = vpop.f32.mrf.mxu0
    %v1070 = vadd.f32 %v1009, %v1069
    %v1071 = vpop.f32.mrf.mxu0
    %v1072 = vpop.f32.mrf.mxu0
    %v1073 = vadd.f32 %v1009, %v1072
    %v1074 = vpop.f32.mrf.mxu0
    %1075 = vmatprep.mubr.bf16.mxu0 0
    %1076 = vmatmul.mubr.bf16.gmra.mxu0 %v407
    %v1077 = vpop.f32.mrf.mxu0
    %v1078 = vadd.f32 %v1009, %v1077
    %v1079 = vpop.f32.mrf.mxu0
    %v1080 = vpop.f32.mrf.mxu0
    %v1081 = vadd.f32 %v1009, %v1080
    %v1082 = vpop.f32.mrf.mxu0
    %1083 = vmatprep.mubr.bf16.mxu0 0
    %1084 = vmatmul.mubr.bf16.gmra.mxu0 %v408
    %v1085 = vpop.f32.mrf.mxu0
    %v1086 = vadd.f32 %v1009, %v1085
    %v1087 = vpop.f32.mrf.mxu0
    %v1088 = vpop.f32.mrf.mxu0
    %v1089 = vadd.f32 %v1009, %v1088
    %v1090 = vpop.f32.mrf.mxu0
    %1091 = vmatprep.mubr.bf16.mxu0 0
    %1092 = vmatmul.mubr.bf16.gmra.mxu0 %v409
    %v1093 = vpop.f32.mrf.mxu0
    %v1094 = vadd.f32 %v1009, %v1093
    %v1095 = vpop.f32.mrf.mxu0
    %v1096 = vpop.f32.mrf.mxu0
    %v1097 = vadd.f32 %v1009, %v1096
    %v1098 = vpop.f32.mrf.mxu0
    %1099 = vmatprep.mubr.bf16.mxu0 0
    %1100 = vmatmul.mubr.bf16.gmra.mxu0 %v410
    %v1101 = vpop.f32.mrf.mxu0
    %v1102 = vadd.f32 %v1009, %v1101
    %v1103 = vpop.f32.mrf.mxu0
    %v1104 = vpop.f32.mrf.mxu0
    %v1105 = vadd.f32 %v1009, %v1104
    %v1106 = vpop.f32.mrf.mxu0
    %1107 = vdwg.mxu0
    %v1108 = vmax.f32 %v1046, 0.0
    %v1109 = vmax.f32 %v1049, 0.0
    %v1110 = vmax.f32 %v1054, 0.0
    %v1111 = vmax.f32 %v1057, 0.0
    %v1112 = vmax.f32 %v1062, 0.0
    %v1113 = vmax.f32 %v1065, 0.0
    %v1114 = vmax.f32 %v1070, 0.0
    %v1115 = vmax.f32 %v1073, 0.0
    %v1116 = vmax.f32 %v1078, 0.0
    %v1117 = vmax.f32 %v1081, 0.0
    %v1118 = vmax.f32 %v1086, 0.0
    %v1119 = vmax.f32 %v1089, 0.0
    %v1120 = vmax.f32 %v1094, 0.0
    %v1121 = vmax.f32 %v1097, 0.0
    %v1122 = vmax.f32 %v1102, 0.0
    %v1123 = vmax.f32 %v1105, 0.0
    %v1124 = vpack.c.bf16 %v1109, %v1108
    %v1125 = vpack.c.bf16 %v1111, %v1110
    %v1126 = vpack.c.bf16 %v1113, %v1112
    %v1127 = vpack.c.bf16 %v1115, %v1114
    %v1128 = vpack.c.bf16 %v1117, %v1116
    %v1129 = vpack.c.bf16 %v1119, %v1118
    %v1130 = vpack.c.bf16 %v1121, %v1120
    %v1131 = vpack.c.bf16 %v1123, %v1122
    %v1140 = vunpack.c.l.b16 %v1124
    %v1141 = vunpack.c.h.b16 %v1124
    %v1142 = vunpack.c.l.b16 %v1125
    %v1143 = vunpack.c.h.b16 %v1125
    %v1144 = vunpack.c.l.b16 %v1126
    %v1145 = vunpack.c.h.b16 %v1126
    %v1146 = vunpack.c.l.b16 %v1127
    %v1147 = vunpack.c.h.b16 %v1127
    %v1148 = vunpack.c.l.b16 %v1128
    %v1149 = vunpack.c.h.b16 %v1128
    %v1150 = vunpack.c.l.b16 %v1129
    %v1151 = vunpack.c.h.b16 %v1129
    %v1152 = vunpack.c.l.b16 %v1130
    %v1153 = vunpack.c.h.b16 %v1130
    %v1154 = vunpack.c.l.b16 %v1131
    %v1155 = vunpack.c.h.b16 %v1131
    %v1156 = vpack.c.b16 %v1140, %v1140
    %v1157 = vpack.c.b16 %v1141, %v1141
    %v1158 = vpack.c.b16 %v1142, %v1142
    %v1159 = vpack.c.b16 %v1143, %v1143
    %v1160 = vpack.c.b16 %v1144, %v1144
    %v1161 = vpack.c.b16 %v1145, %v1145
    %v1162 = vpack.c.b16 %v1146, %v1146
    %v1163 = vpack.c.b16 %v1147, %v1147
    %v1164 = vpack.c.b16 %v1148, %v1148
    %v1165 = vpack.c.b16 %v1149, %v1149
    %v1166 = vpack.c.b16 %v1150, %v1150
    %v1167 = vpack.c.b16 %v1151, %v1151
    %v1168 = vpack.c.b16 %v1152, %v1152
    %v1169 = vpack.c.b16 %v1153, %v1153
    %v1170 = vpack.c.b16 %v1154, %v1154
    %v1171 = vpack.c.b16 %v1155, %v1155
    %1188 = vst [vmem:[#allocation13] sm:$0xf] %v1156
    %1189 = vst [vmem:[#allocation13 + $0x4] sm:$0xf] %v1157
    %1190 = vst [vmem:[#allocation13 + $0x8] sm:$0xf] %v1158
    %1191 = vst [vmem:[#allocation13 + $0xc] sm:$0xf] %v1159
    %1192 = vst [vmem:[#allocation13 + $0x10] sm:$0xf] %v1160
    %1193 = vst [vmem:[#allocation13 + $0x14] sm:$0xf] %v1161
    %1194 = vst [vmem:[#allocation13 + $0x18] sm:$0xf] %v1162
    %1195 = vst [vmem:[#allocation13 + $0x1c] sm:$0xf] %v1163
    %1196 = vst [vmem:[#allocation13 + $0x20] sm:$0xf] %v1164
    %1197 = vst [vmem:[#allocation13 + $0x24] sm:$0xf] %v1165
    %1198 = vst [vmem:[#allocation13 + $0x28] sm:$0xf] %v1166
    %1199 = vst [vmem:[#allocation13 + $0x2c] sm:$0xf] %v1167
    %1200 = vst [vmem:[#allocation13 + $0x30] sm:$0xf] %v1168
    %1201 = vst [vmem:[#allocation13 + $0x34] sm:$0xf] %v1169
    %1202 = vst [vmem:[#allocation13 + $0x38] sm:$0xf] %v1170
    %1203 = vst [vmem:[#allocation13 + $0x3c] sm:$0xf] %v1171
    %v1204 = vld [vmem:[#allocation7] sm:$0xff]
    %1205 = vmatprep.subr.mxu0 0.0
    %1206 = vmatpush1.msra.mxu0 %v1123
    %1207 = vmatprep.subr.mxu0 0.0
    %1208 = vmatpush1.msra.mxu0 %v1122
    %1209 = vmatprep.subr.mxu0 0.0
    %1210 = vmatpush1.msra.mxu0 %v1121
    %1211 = vmatprep.subr.mxu0 0.0
    %1212 = vmatpush1.msra.mxu0 %v1120
    %1213 = vmatprep.subr.mxu0 0.0
    %1214 = vmatpush1.msra.mxu0 %v1119
    %1215 = vmatprep.subr.mxu0 0.0
    %1216 = vmatpush1.msra.mxu0 %v1118
    %1217 = vmatprep.subr.mxu0 0.0
    %1218 = vmatpush1.msra.mxu0 %v1117
    %1219 = vmatprep.subr.mxu0 0.0
    %1220 = vmatpush1.msra.mxu0 %v1116
    %1221 = vmatprep.subr.mxu0 0.0
    %1222 = vmatpush1.msra.mxu0 %v1115
    %1223 = vmatprep.subr.mxu0 0.0
    %1224 = vmatpush1.msra.mxu0 %v1114
    %1225 = vmatprep.subr.mxu0 0.0
    %1226 = vmatpush1.msra.mxu0 %v1113
    %1227 = vmatprep.subr.mxu0 0.0
    %1228 = vmatpush1.msra.mxu0 %v1112
    %1229 = vmatprep.subr.mxu0 0.0
    %1230 = vmatpush1.msra.mxu0 %v1111
    %1231 = vmatprep.subr.mxu0 0.0
    %1232 = vmatpush1.msra.mxu0 %v1110
    %1233 = vmatprep.subr.mxu0 0.0
    %1234 = vmatpush1.msra.mxu0 %v1109
    %1235 = vmatprep.subr.mxu0 0.0
    %1236 = vmatpush1.msra.mxu0 %v1108
    %1237 = vmatprep.subr.mxu0 0.0
    %1238 = vmatpush2.msra.mxu0 0.0
    %1239 = vmatprep.subr.mxu0 0.0
    %1240 = vmatpush2.msra.mxu0 0.0
    %1241 = vmatprep.subr.mxu0 0.0
    %1242 = vmatpush2.msra.mxu0 0.0
    %1243 = vmatprep.subr.mxu0 0.0
    %1244 = vmatpush2.msra.mxu0 0.0
    %1245 = vmatprep.subr.mxu0 0.0
    %1246 = vmatpush2.msra.mxu0 0.0
    %1247 = vmatprep.subr.mxu0 0.0
    %1248 = vmatpush2.msra.mxu0 0.0
    %1249 = vmatprep.subr.mxu0 0.0
    %1250 = vmatpush2.msra.mxu0 0.0
    %1251 = vmatprep.subr.mxu0 0.0
    %1252 = vmatpush2.msra.mxu0 0.0
    %1253 = vmatprep.subr.mxu0 0.0
    %1254 = vmatpush2.msra.mxu0 0.0
    %1255 = vmatprep.subr.mxu0 0.0
    %1256 = vmatpush2.msra.mxu0 0.0
    %1257 = vmatprep.subr.mxu0 0.0
    %1258 = vmatpush2.msra.mxu0 0.0
    %1259 = vmatprep.subr.mxu0 0.0
    %1260 = vmatpush2.msra.mxu0 0.0
    %1261 = vmatprep.subr.mxu0 0.0
    %1262 = vmatpush2.msra.mxu0 0.0
    %1263 = vmatprep.subr.mxu0 0.0
    %1264 = vmatpush2.msra.mxu0 0.0
    %1265 = vmatprep.subr.mxu0 0.0
    %1266 = vmatpush2.msra.mxu0 0.0
    %1267 = vmatprep.subr.mxu0 0.0
    %1268 = vmatpush2.msra.mxu0 0.0
    %1269 = vmatprep.mubr.f32.mxu0 0.0
    %1270 = vmatmul.mubr.f32.gmra.mxu0 %v1204
    %v1271 = vpop.f32.mrf.mxu0
    %v1272 = vadd.f32 0.0, %v1271
    %v1273 = vpop.f32.mrf.mxu0
    %1274 = vdwg.mxu0
    %1275 = vst [vmem:[#allocation14] sm:$0xff] %v1272
    %v1276 = vld [vmem:[#allocation10 + $0x8] sm:$0xf]
    %v1277 = vld [vmem:[#allocation10 + $0x14] sm:$0xf]
    %v1278 = vld [vmem:[#allocation10 + $0x20] sm:$0xf]
    %v1279 = vld [vmem:[#allocation10 + $0x2c] sm:$0xf]
    %v1280 = vld [vmem:[#allocation10 + $0x38] sm:$0xf]
    %v1281 = vld [vmem:[#allocation10 + $0x44] sm:$0xf]
    %v1282 = vld [vmem:[#allocation10 + $0x50] sm:$0xf]
    %v1283 = vld [vmem:[#allocation10 + $0x5c] sm:$0xf]
    %v1284 = vld [vmem:[#allocation10 + $0x68] sm:$0xf]
    %v1285 = vld [vmem:[#allocation10 + $0x74] sm:$0xf]
    %v1286 = vld [vmem:[#allocation10 + $0x80] sm:$0xf]
    %v1287 = vld [vmem:[#allocation10 + $0x8c] sm:$0xf]
    %v1288 = vld [vmem:[#allocation10 + $0x98] sm:$0xf]
    %v1289 = vld [vmem:[#allocation10 + $0xa4] sm:$0xf]
    %v1290 = vld [vmem:[#allocation10 + $0xb0] sm:$0xf]
    %v1291 = vld [vmem:[#allocation10 + $0xbc] sm:$0xf]
    %v1292 = vpack.c.bf16 %v1272, %v1272
    %v1309 = vunpack.c.l.b16 %v1276
    %v1310 = vunpack.c.l.b16 %v1277
    %v1311 = vunpack.c.l.b16 %v1278
    %v1312 = vunpack.c.l.b16 %v1279
    %v1313 = vunpack.c.l.b16 %v1280
    %v1314 = vunpack.c.l.b16 %v1281
    %v1315 = vunpack.c.l.b16 %v1282
    %v1316 = vunpack.c.l.b16 %v1283
    %v1317 = vunpack.c.l.b16 %v1284
    %v1318 = vunpack.c.l.b16 %v1285
    %v1319 = vunpack.c.l.b16 %v1286
    %v1320 = vunpack.c.l.b16 %v1287
    %v1321 = vunpack.c.l.b16 %v1288
    %v1322 = vunpack.c.l.b16 %v1289
    %v1323 = vunpack.c.l.b16 %v1290
    %v1324 = vunpack.c.l.b16 %v1291
    %v1325 = vpack.c.b16 %v1310, %v1309
    %v1326 = vpack.c.b16 %v1312, %v1311
    %v1327 = vpack.c.b16 %v1314, %v1313
    %v1328 = vpack.c.b16 %v1316, %v1315
    %v1329 = vpack.c.b16 %v1318, %v1317
    %v1330 = vpack.c.b16 %v1320, %v1319
    %v1331 = vpack.c.b16 %v1322, %v1321
    %v1332 = vpack.c.b16 %v1324, %v1323
    %1341 = vmatprep.subr.bf16.mxu0 0
    %1342 = vmatpush1.bf16.msra.mxu0 %v1332
    %1343 = vmatprep.subr.bf16.mxu0 0
    %1344 = vmatpush1.bf16.msra.mxu0 %v1331
    %1345 = vmatprep.subr.bf16.mxu0 0
    %1346 = vmatpush1.bf16.msra.mxu0 %v1330
    %1347 = vmatprep.subr.bf16.mxu0 0
    %1348 = vmatpush1.bf16.msra.mxu0 %v1329
    %1349 = vmatprep.subr.bf16.mxu0 0
    %1350 = vmatpush1.bf16.msra.mxu0 %v1328
    %1351 = vmatprep.subr.bf16.mxu0 0
    %1352 = vmatpush1.bf16.msra.mxu0 %v1327
    %1353 = vmatprep.subr.bf16.mxu0 0
    %1354 = vmatpush1.bf16.msra.mxu0 %v1326
    %1355 = vmatprep.subr.bf16.mxu0 0
    %1356 = vmatpush1.bf16.msra.mxu0 %v1325
    %1357 = vmatprep.subr.bf16.mxu0 0
    %1358 = vmatpush2.bf16.msra.mxu0 0
    %1359 = vmatprep.subr.bf16.mxu0 0
    %1360 = vmatpush2.bf16.msra.mxu0 0
    %1361 = vmatprep.subr.bf16.mxu0 0
    %1362 = vmatpush2.bf16.msra.mxu0 0
    %1363 = vmatprep.subr.bf16.mxu0 0
    %1364 = vmatpush2.bf16.msra.mxu0 0
    %1365 = vmatprep.subr.bf16.mxu0 0
    %1366 = vmatpush2.bf16.msra.mxu0 0
    %1367 = vmatprep.subr.bf16.mxu0 0
    %1368 = vmatpush2.bf16.msra.mxu0 0
    %1369 = vmatprep.subr.bf16.mxu0 0
    %1370 = vmatpush2.bf16.msra.mxu0 0
    %1371 = vmatprep.subr.bf16.mxu0 0
    %1372 = vmatpush2.bf16.msra.mxu0 0
    %1373 = vmatprep.mubr.bf16.mxu0 0
    %1374 = vmatmul.mubr.bf16.gmra.mxu0 %v1292
    %v1375 = vpop.f32.mrf.mxu0
    %v1376 = vadd.f32 0.0, %v1375
    %v1377 = vpop.f32.mrf.mxu0
    %v1378 = vpop.f32.mrf.mxu0
    %v1379 = vpop.f32.mrf.mxu0
    %1380 = vdwg.mxu0
    %v1381 = vmul.f32 %v1272, %v1272
    %1382 = vadd.xlane.f32.xlu0 %v1381
    %v1383 = vpop.xlane.xlu0 %1382
    %v1384 = vmul.f32 %v1376, -2.0
    %v1385 = vadd.f32 %v1384, %v1383
    %v1387 = vlaneseq
    %v1388 = vshrl.u32 %v1387, 7
    %v1389 = vsub.s32 0, %v1388
    %v1390 = vrot.slane %v130, %v1389
    %v1392 = vadd.f32 %v1385, %v1390
    %1393 = vst [vmem:[#allocation14 + $0x8] sm:$0xff] %v1392
    %v1394 = vmax.f32 %v1392, 0.0
    %v1395 = vadd.f32 %v1394, 1.0
    %v1396 = vadd.f32 %v1394, 0.0001
    %v1397 = vrcp.pop %v1396
    %v1398 = vmul.f32 %v1395, %v1397
    %v1399 = vlog2.pop %v1398
    %v1400 = vmul.f32 %v1399, 0.6931472
    %v1401 = vpack.c.bf16 %v1400, %v1400
    %v1402 = vld [vmem:[#allocation11] sm:$0xf]
    %v1403 = vld [vmem:[#allocation11 + $0x4] sm:$0xf]
    %v1404 = vld [vmem:[#allocation11 + $0x8] sm:$0xf]
    %v1405 = vld [vmem:[#allocation11 + $0xc] sm:$0xf]
    %v1406 = vld [vmem:[#allocation11 + $0x10] sm:$0xf]
    %v1407 = vld [vmem:[#allocation11 + $0x14] sm:$0xf]
    %v1408 = vld [vmem:[#allocation11 + $0x18] sm:$0xf]
    %v1409 = vld [vmem:[#allocation11 + $0x1c] sm:$0xf]
    %v1410 = vld [vmem:[#allocation11 + $0x20] sm:$0xf]
    %v1411 = vld [vmem:[#allocation11 + $0x24] sm:$0xf]
    %v1412 = vld [vmem:[#allocation11 + $0x28] sm:$0xf]
    %v1413 = vld [vmem:[#allocation11 + $0x2c] sm:$0xf]
    %v1414 = vld [vmem:[#allocation11 + $0x30] sm:$0xf]
    %v1415 = vld [vmem:[#allocation11 + $0x34] sm:$0xf]
    %v1416 = vld [vmem:[#allocation11 + $0x38] sm:$0xf]
    %v1417 = vld [vmem:[#allocation11 + $0x3c] sm:$0xf]
    %v1434 = vunpack.c.l.b16 %v1402
    %v1435 = vunpack.c.l.b16 %v1403
    %v1436 = vunpack.c.l.b16 %v1404
    %v1437 = vunpack.c.l.b16 %v1405
    %v1438 = vunpack.c.l.b16 %v1406
    %v1439 = vunpack.c.l.b16 %v1407
    %v1440 = vunpack.c.l.b16 %v1408
    %v1441 = vunpack.c.l.b16 %v1409
    %v1442 = vunpack.c.l.b16 %v1410
    %v1443 = vunpack.c.l.b16 %v1411
    %v1444 = vunpack.c.l.b16 %v1412
    %v1445 = vunpack.c.l.b16 %v1413
    %v1446 = vunpack.c.l.b16 %v1414
    %v1447 = vunpack.c.l.b16 %v1415
    %v1448 = vunpack.c.l.b16 %v1416
    %v1449 = vunpack.c.l.b16 %v1417
    %v1450 = vpack.c.b16 %v1435, %v1434
    %v1451 = vpack.c.b16 %v1437, %v1436
    %v1452 = vpack.c.b16 %v1439, %v1438
    %v1453 = vpack.c.b16 %v1441, %v1440
    %v1454 = vpack.c.b16 %v1443, %v1442
    %v1455 = vpack.c.b16 %v1445, %v1444
    %v1456 = vpack.c.b16 %v1447, %v1446
    %v1457 = vpack.c.b16 %v1449, %v1448
    %1466 = vmatprep.subr.bf16.mxu0 0
    %1467 = vmatpush1.bf16.msra.mxu0 %v1457
    %1468 = vmatprep.subr.bf16.mxu0 0
    %1469 = vmatpush1.bf16.msra.mxu0 %v1456
    %1470 = vmatprep.subr.bf16.mxu0 0
    %1471 = vmatpush1.bf16.msra.mxu0 %v1455
    %1472 = vmatprep.subr.bf16.mxu0 0
    %1473 = vmatpush1.bf16.msra.mxu0 %v1454
    %1474 = vmatprep.subr.bf16.mxu0 0
    %1475 = vmatpush1.bf16.msra.mxu0 %v1453
    %1476 = vmatprep.subr.bf16.mxu0 0
    %1477 = vmatpush1.bf16.msra.mxu0 %v1452
    %1478 = vmatprep.subr.bf16.mxu0 0
    %1479 = vmatpush1.bf16.msra.mxu0 %v1451
    %1480 = vmatprep.subr.bf16.mxu0 0
    %1481 = vmatpush1.bf16.msra.mxu0 %v1450
    %1482 = vmatprep.subr.bf16.mxu0 0
    %1483 = vmatpush2.bf16.msra.mxu0 0
    %1484 = vmatprep.subr.bf16.mxu0 0
    %1485 = vmatpush2.bf16.msra.mxu0 0
    %1486 = vmatprep.subr.bf16.mxu0 0
    %1487 = vmatpush2.bf16.msra.mxu0 0
    %1488 = vmatprep.subr.bf16.mxu0 0
    %1489 = vmatpush2.bf16.msra.mxu0 0
    %1490 = vmatprep.subr.bf16.mxu0 0
    %1491 = vmatpush2.bf16.msra.mxu0 0
    %1492 = vmatprep.subr.bf16.mxu0 0
    %1493 = vmatpush2.bf16.msra.mxu0 0
    %1494 = vmatprep.subr.bf16.mxu0 0
    %1495 = vmatpush2.bf16.msra.mxu0 0
    %1496 = vmatprep.subr.bf16.mxu0 0
    %1497 = vmatpush2.bf16.msra.mxu0 0
    %1498 = vmatprep.mubr.bf16.mxu0 0
    %1499 = vmatmul.mubr.bf16.gmra.mxu0 %v1401
    %v1500 = vpop.f32.mrf.mxu0
    %v1501 = vadd.f32 0.0, %v1500
    %v1502 = vpop.f32.mrf.mxu0
    %v1503 = vpop.f32.mrf.mxu0
    %v1504 = vpop.f32.mrf.mxu0
    %1505 = vdwg.mxu0
    %1506 = vst [vmem:[#allocation14 + $0x10] sm:$0xff] %v1501
    %v1508 = vlaneseq
    %v1509 = vshrl.u32 %v1508, 7
    %v1510 = vsub.s32 0, %v1509
    %v1511 = vrot.slane %v131, %v1510
    %v1513 = vadd.f32 %v1501, %v1511
    %1514 = vmax.xlane.f32.xlu0 %v1513
    %v1515 = vpop.xlane.xlu0 %1514
    %v1516 = vsub.f32 %v1513, %v1515
    %v1517 = vmul.f32 %v1516, 1.442695
    %v1518 = vpow.pop %v1517
    %1519 = vadd.xlane.f32.xlu0 %v1518
    %v1520 = vpop.xlane.xlu0 %1519
    %v1521 = vrcp.pop %v1520
    %v1522 = vmul.f32 %v1518, %v1521
    %1523 = vst [vmem:[#allocation14 + $0x18] sm:$0xff] %v1522
    // Predicated region
    $region54: #{tpu_custom_call.1} parent=1 // pred_check
      _
    $region55: #{tpu_custom_call.1} parent=1 // pred_check_branch
      %1525 = sbr.rel (0) target = $region57
    $region56: #{tpu_custom_call.1} parent=1 // pred_region
      %s1527 = ssub.s32 1024, 1024
      %1528 = vsyncadd [#allocation4], %s1527
      %s1529 = sshll.u32 [#allocation13], 4
      %s1530 = int_to_ptr.vmem [resolvable:$true] %s1529
      %1535 = dma.vmem_to_hbm [thread:$0]  %s1530, 1024, %s7, [#allocation4], 64, 64, 4
    $region57: #{tpu_custom_call.1} parent=1 // pred_fallthru
      _
    // Predicated region
    $region58: #{tpu_custom_call.1} parent=1 // pred_check
      _
    $region59: #{tpu_custom_call.1} parent=1 // pred_check_branch
      %1537 = sbr.rel (0) target = $region61
    $region60: #{tpu_custom_call.1} parent=1 // pred_region
      %s1539 = ssub.s32 512, 512
      %1540 = vsyncadd [#allocation15], %s1539
      %s1542 = sshll.u32 [#allocation14], 4
      %s1543 = int_to_ptr.vmem [resolvable:$true] %s1542
      %1545 = dma.vmem_to_hbm [thread:$0]  %s1543, 512, %s8, [#allocation15]
    $region61: #{tpu_custom_call.1} parent=1 // pred_fallthru
      _
    // Predicated region
    $region62: #{tpu_custom_call.1} parent=1 // pred_check
      _
    $region63: #{tpu_custom_call.1} parent=1 // pred_check_branch
      %1547 = sbr.rel (0) target = $region65
    $region64: #{tpu_custom_call.1} parent=1 // pred_region
      %1548 = dma.done [#allocation4], 1024
    $region65: #{tpu_custom_call.1} parent=1 // pred_fallthru
      _
    // Predicated region
    $region66: #{tpu_custom_call.1} parent=1 // pred_check
      _
    $region67: #{tpu_custom_call.1} parent=1 // pred_check_branch
      %1550 = sbr.rel (0) target = $region69
    $region68: #{tpu_custom_call.1} parent=1 // pred_region
      %1551 = dma.done [#allocation15], 512
    $region69: #{tpu_custom_call.1} parent=1 // pred_fallthru
      _
    %1552 = vsyncpa [#allocation3], 1
    %1553 = vsyncpa [#allocation6], 1
    %1554 = vsyncpa [#allocation9], 1
    %1555 = vsyncpa [#allocation12], 1
    %1556 = vsyncpa [#allocation4], 1
    %1557 = vsyncpa [#allocation15], 1

</llo_original>
